<compile_context>
chip_gen: v7x
topology: tpu7x:2x2x1
jax: 0.10.0
libtpu: 0.0.40
codegen_flags: <defaults>
</compile_context>

<pallas_src>
import functools

import jax
import jax.numpy as jnp
from jax.experimental import pallas as pl
from jax.experimental.pallas import tpu as pltpu


def _make_encoder_layer_kernel(n_head, d_k, d_v, ffn_chunk, eps=1e-6):

    def kernel(x_ref, mask_ref,
               wq_ref, wk_ref, wv_ref, wo_ref,
               ln1_g_ref, ln1_b_ref,
               w1_ref, b1_ref, w2_ref, b2_ref,
               ln2_g_ref, ln2_b_ref,
               out_ref, attn_ref):
        bt, L, D = x_ref.shape
        d_inner = w1_ref.shape[1]

        x = x_ref[...]                               # (bt, L, D) f32 (residual path)
        x2 = x.reshape(bt * L, D)
        xb = x2.astype(jnp.bfloat16)

        # Additive mask bias, built ONCE per block (replaces a per-head
        # compare+select). mask == 0 -> -1e9, matching torch masked_fill.
        bias = jnp.where(mask_ref[...] == 0, jnp.float32(-1e9), jnp.float32(0.0))

        # ---- fused full-width QKV projections ----
        # bf16 operands, f32 MXU accumulation, narrowed to bf16 in the same
        # expression so no f32 Q/K/V copies stay live.
        # 1/sqrt(d_k) softmax temperature is pre-folded into wq by the wrapper.
        qb = jnp.dot(xb, wq_ref[...], preferred_element_type=jnp.float32
                     ).astype(jnp.bfloat16).reshape(bt, L, n_head * d_k)
        kb = jnp.dot(xb, wk_ref[...], preferred_element_type=jnp.float32
                     ).astype(jnp.bfloat16).reshape(bt, L, n_head * d_k)
        vb = jnp.dot(xb, wv_ref[...], preferred_element_type=jnp.float32
                     ).astype(jnp.bfloat16).reshape(bt, L, n_head * d_v)

        # ---- attention ----
        # Scores/softmax are intrinsically K=d_k per head; head outputs are
        # concatenated so the output projection is ONE K=n_head*d_v matmul,
        # and attention probabilities are written with ONE full-block store.
        p_heads = []
        o_heads = []
        for h in range(n_head):                      # static unroll, n_head small
            qh = qb[:, :, h * d_k:(h + 1) * d_k]
            kh = kb[:, :, h * d_k:(h + 1) * d_k]
            vh = vb[:, :, h * d_v:(h + 1) * d_v]

            s = jnp.einsum('bqd,bkd->bqk', qh, kh,
                           preferred_element_type=jnp.float32) + bias   # (bt, L, L)
            p = jnp.exp(s - jnp.max(s, axis=-1, keepdims=True))
            # approx reciprocal runs on the EUP (free slot); row sums deviate
            # from 1 by far less than the bf16 resolution of the attn output.
            p = p * pl.reciprocal(jnp.sum(p, axis=-1, keepdims=True), approx=True)

            p_heads.append(p.astype(attn_ref.dtype))
            o_h = jnp.einsum('bqk,bkd->bqd', p.astype(jnp.bfloat16), vh,
                             preferred_element_type=jnp.float32)        # (bt, L, d_v)
            o_heads.append(o_h.astype(jnp.bfloat16))

        attn_ref[...] = jnp.stack(p_heads, axis=1)   # (bt, H, L, L), single store

        o = jnp.concatenate(o_heads, axis=-1).reshape(bt * L, n_head * d_v)
        proj = jnp.dot(o, wo_ref[...], preferred_element_type=jnp.float32)

        # ---- residual + LayerNorm 1 (f32) ----
        res1 = proj + x2
        mu1 = jnp.mean(res1, axis=-1, keepdims=True)
        var1 = jnp.mean((res1 - mu1) ** 2, axis=-1, keepdims=True)
        y1 = (res1 - mu1) * jax.lax.rsqrt(var1 + eps) * ln1_g_ref[...] + ln1_b_ref[...]
        y1b = y1.astype(jnp.bfloat16)

        # ---- position-wise FFN (bf16 matmuls, f32 acc), chunked over d_inner
        # so only a (bt*L, ffn_chunk) hidden slice is live at a time ----
        if d_inner <= ffn_chunk or d_inner % ffn_chunk:
            hdn = jnp.dot(y1b, w1_ref[...], preferred_element_type=jnp.float32)
            hdn = jnp.maximum(hdn + b1_ref[...], 0.0)                   # ReLU(x@W1+b1)
            ff = jnp.dot(hdn.astype(jnp.bfloat16), w2_ref[...],
                         preferred_element_type=jnp.float32)
        else:
            n_chunks = d_inner // ffn_chunk

            def body(c, acc):
                start = pl.multiple_of(c * ffn_chunk, ffn_chunk)
                h = jnp.dot(y1b, w1_ref[:, pl.ds(start, ffn_chunk)],
                            preferred_element_type=jnp.float32)
                h = jnp.maximum(h + b1_ref[:, pl.ds(start, ffn_chunk)], 0.0)
                return acc + jnp.dot(h.astype(jnp.bfloat16),
                                     w2_ref[pl.ds(start, ffn_chunk), :],
                                     preferred_element_type=jnp.float32)

            ff = jax.lax.fori_loop(0, n_chunks, body,
                                   jnp.zeros((bt * L, D), jnp.float32))

        res2 = ff + b2_ref[...] + y1
        mu2 = jnp.mean(res2, axis=-1, keepdims=True)
        var2 = jnp.mean((res2 - mu2) ** 2, axis=-1, keepdims=True)
        y2 = (res2 - mu2) * jax.lax.rsqrt(var2 + eps) * ln2_g_ref[...] + ln2_b_ref[...]

        out_ref[...] = y2.reshape(bt, L, D).astype(out_ref.dtype)

    return kernel


def _vmem_capacity_bytes():
    """Physical VMEM per TensorCore (128 MiB v5e/v6e, 64 MiB v7x)."""
    try:
        return int(pltpu.get_tpu_info().vmem_capacity_bytes)
    except Exception:
        return 64 * 1024 * 1024                      # conservative fallback


def _pick_block_b(B, L, D, n_head, d_k, d_v, d_inner, ffn_chunk, attn_isize,
                  budget_bytes):
    """Largest divisor of B whose per-block activation footprint fits budget,
    adjusted so the grid has >= 2 steps when possible (v7x has 2 TCs)."""
    h_dk, h_dv = n_head * d_k, n_head * d_v
    per_elem = (4 * L * (8 * D + min(d_inner, ffn_chunk))    # f32 residuals/LN/FFN chunk
                + 2 * L * (2 * h_dk + 2 * h_dv)              # bf16 q/k/v + concat heads
                + 4 * L * L * 3                              # mask bias + scores/probs
                + attn_isize * n_head * L * L)               # stacked attention output
    bt = max(1, min(B, budget_bytes // max(per_elem, 1)))
    while B % bt:
        bt -= 1
    if bt == B and B > 1:                            # guarantee >= 2 grid steps
        bt = max(1, B // 2)
        while B % bt:
            bt -= 1
    return int(bt)


def _vmem_limit_bytes(bt, L, D, n_head, d_k, d_v, d_inner, ffn_chunk, attn_isize):
    """VMEM budget from actual tile sizes, capped per TPU generation."""
    h_dk, h_dv = n_head * d_k, n_head * d_v
    weights = 2 * (2 * D * h_dk + D * h_dv + h_dv * D + 2 * D * d_inner)   # bf16
    small = 4 * (5 * D + d_inner)                                          # biases/LN
    blocks = bt * (2 * 4 * L * D + 4 * L * L + attn_isize * n_head * L * L)
    live = bt * L * (2 * (2 * h_dk + 2 * h_dv)               # bf16 q/k/v + head concat
                     + 4 * 3 * L + attn_isize * n_head * L   # scores/probs + stacked p
                     + 4 * 6 * D                             # proj/res/y1/ff/y2
                     + 4 * min(d_inner, ffn_chunk))          # FFN hidden chunk
    est = 2 * (weights + small + blocks) + live              # double-buffered pipeline
    cap = max(int(0.8 * _vmem_capacity_bytes()), 32 * 1024 * 1024)
    return int(min(max(est, 32 * 1024 * 1024), cap))


@functools.partial(
    jax.jit,
    static_argnames=("n_head", "d_k", "d_v", "block_b", "ffn_chunk", "attn_dtype"))
def encoder_layer(enc_input, params, slf_attn_mask, *, n_head, d_k, d_v,
                  block_b=None, ffn_chunk=1024, attn_dtype=jnp.bfloat16):
    """enc_input: (B, L, d_model) f32; slf_attn_mask: (B, L, L) int32 (1 = keep)."""
    B, L, D = enc_input.shape
    d_inner = params["w1"].shape[1]
    attn_isize = jnp.dtype(attn_dtype).itemsize

    # Activation budget per block: ~1/6 of physical VMEM (leaves room for
    # double-buffered weights), i.e. ~21 MiB on 128 MiB parts, ~10 MiB on v7x.
    budget = max(_vmem_capacity_bytes() // 6, 8 * 1024 * 1024)
    bt = (_pick_block_b(B, L, D, n_head, d_k, d_v, d_inner, ffn_chunk,
                        attn_isize, budget)
          if block_b is None else block_b)
    assert B % bt == 0

    # Weights pre-cast to bf16 once (halves HBM->VMEM traffic / VMEM footprint);
    # softmax temperature folded into Wq at trace time (removes an in-kernel mul).
    inv_temp = 1.0 / (d_k ** 0.5)
    wq = (params["wq"] * inv_temp).astype(jnp.bfloat16)
    wk = params["wk"].astype(jnp.bfloat16)
    wv = params["wv"].astype(jnp.bfloat16)
    wo = params["wo"].astype(jnp.bfloat16)
    w1 = params["w1"].astype(jnp.bfloat16)
    w2 = params["w2"].astype(jnp.bfloat16)

    kernel = _make_encoder_layer_kernel(n_head, d_k, d_v, ffn_chunk)

    # Grid-invariant (replicated) operands; the pipeline skips redundant DMA
    # for constant block indices so the only cost is their VMEM residency.
    rep2d = lambda shape: pl.BlockSpec(shape, lambda b: (0, 0))

    out_shapes = (
        jax.ShapeDtypeStruct((B, L, D), jnp.float32),            # enc_output
        jax.ShapeDtypeStruct((B, n_head, L, L), attn_dtype),     # enc_slf_attn
    )

    grid_spec = pltpu.PrefetchScalarGridSpec(
        num_scalar_prefetch=0,
        grid=(B // bt,),
        in_specs=[
            pl.BlockSpec((bt, L, D), lambda b: (b, 0, 0)),       # x
            pl.BlockSpec((bt, L, L), lambda b: (b, 0, 0)),       # mask
            rep2d((D, n_head * d_k)),                            # Wq (pre-scaled, bf16)
            rep2d((D, n_head * d_k)),                            # Wk
            rep2d((D, n_head * d_v)),                            # Wv
            rep2d((n_head * d_v, D)),                            # Wo
            rep2d((1, D)), rep2d((1, D)),                        # LN1 gamma/beta
            rep2d((D, d_inner)), rep2d((1, d_inner)),            # W1, b1
            rep2d((d_inner, D)), rep2d((1, D)),                  # W2, b2
            rep2d((1, D)), rep2d((1, D)),                        # LN2 gamma/beta
        ],
        out_specs=[
            pl.BlockSpec((bt, L, D), lambda b: (b, 0, 0)),
            pl.BlockSpec((bt, n_head, L, L), lambda b: (b, 0, 0, 0)),
        ],
    )

    h_dk, h_dv = n_head * d_k, n_head * d_v
    flops = int(2 * B * L * D * (2 * h_dk + h_dv)          # QKV projections
                + 2 * B * n_head * L * L * (d_k + d_v)     # scores + attn @ V
                + 2 * B * L * h_dv * D                     # output projection
                + 4 * B * L * D * d_inner)                 # two FFN matmuls
    transcendentals = int(B * n_head * L * L + 2 * B * L)  # exp + rsqrt
    bytes_accessed = int(4 * B * L * D * 2 + 4 * B * L * L
                         + attn_isize * B * n_head * L * L
                         + 2 * (2 * D * h_dk + D * h_dv + h_dv * D + 2 * D * d_inner)
                         + 4 * (5 * D + d_inner))
    cost = pl.CostEstimate(flops=flops, transcendentals=transcendentals,
                           bytes_accessed=bytes_accessed)

    enc_output, enc_slf_attn = pl.pallas_call(
        kernel,
        out_shape=out_shapes,
        grid_spec=grid_spec,
        compiler_params=pltpu.CompilerParams(
            dimension_semantics=("parallel",),   # batch blocks are independent
            vmem_limit_bytes=_vmem_limit_bytes(bt, L, D, n_head, d_k, d_v,
                                               d_inner, ffn_chunk, attn_isize),
        ),
        cost_estimate=cost,
    )(enc_input, slf_attn_mask,
      wq, wk, wv, wo,
      params["ln1_g"], params["ln1_b"],
      w1, params["b1"], w2, params["b2"],
      params["ln2_g"], params["ln2_b"])
    return enc_output, enc_slf_attn


def _reference(enc_input, params, mask, n_head, d_k, d_v,
               matmul_dtype=jnp.float32, eps=1e-6):
    """Pure-JAX replica of the PyTorch forward (eval mode).

    matmul_dtype=float32  -> exact module semantics.
    matmul_dtype=bfloat16 -> mirrors the kernel's bf16 matmul inputs.
    """
    B, L, D = enc_input.shape
    md = matmul_dtype
    x = enc_input
    wq = (params["wq"] / (d_k ** 0.5)).astype(md)
    wk = params["wk"].astype(md)
    wv = params["wv"].astype(md)
    wo = params["wo"].astype(md)
    w1 = params["w1"].astype(md)
    w2 = params["w2"].astype(md)

    xb = x.astype(md)
    q = jnp.dot(xb, wq, preferred_element_type=jnp.float32)
    k = jnp.dot(xb, wk, preferred_element_type=jnp.float32)
    v = jnp.dot(xb, wv, preferred_element_type=jnp.float32)
    qh = q.astype(md).reshape(B, L, n_head, d_k)
    kh = k.astype(md).reshape(B, L, n_head, d_k)
    vh = v.astype(md).reshape(B, L, n_head, d_v)

    s = jnp.einsum("bqhd,bkhd->bhqk", qh, kh, preferred_element_type=jnp.float32)
    s = jnp.where(mask[:, None, :, :] == 0, -1e9, s)
    attn = jax.nn.softmax(s, axis=-1)
    o = jnp.einsum("bhqk,bkhd->bqhd", attn.astype(md), vh,
                   preferred_element_type=jnp.float32)
    o = o.reshape(B, L, n_head * d_v)
    proj = jnp.dot(o.astype(md), wo, preferred_element_type=jnp.float32)

    res1 = proj + x
    mu = res1.mean(-1, keepdims=True)
    var = ((res1 - mu) ** 2).mean(-1, keepdims=True)
    y1 = (res1 - mu) * jax.lax.rsqrt(var + eps) * params["ln1_g"][0] + params["ln1_b"][0]

    h = jnp.maximum(jnp.dot(y1.astype(md), w1, preferred_element_type=jnp.float32)
                    + params["b1"][0], 0.0)
    f = jnp.dot(h.astype(md), w2, preferred_element_type=jnp.float32) + params["b2"][0] + y1
    mu2 = f.mean(-1, keepdims=True)
    var2 = ((f - mu2) ** 2).mean(-1, keepdims=True)
    y2 = (f - mu2) * jax.lax.rsqrt(var2 + eps) * params["ln2_g"][0] + params["ln2_b"][0]
    return y2, attn


if __name__ == "__main__":
    # Small shapes consistent with the module.
    B, L = 2, 8
    d_model, d_inner, n_head, d_k, d_v = 32, 64, 2, 16, 16

    key = jax.random.PRNGKey(0)
    ks = jax.random.split(key, 9)
    scale = 0.1
    params = {
        "wq": scale * jax.random.normal(ks[0], (d_model, n_head * d_k), jnp.float32),
        "wk": scale * jax.random.normal(ks[1], (d_model, n_head * d_k), jnp.float32),
        "wv": scale * jax.random.normal(ks[2], (d_model, n_head * d_v), jnp.float32),
        "wo": scale * jax.random.normal(ks[3], (n_head * d_v, d_model), jnp.float32),
        "ln1_g": jnp.ones((1, d_model), jnp.float32),   # nn.LayerNorm defaults
        "ln1_b": jnp.zeros((1, d_model), jnp.float32),
        "w1": scale * jax.random.normal(ks[4], (d_model, d_inner), jnp.float32),
        "b1": scale * jax.random.normal(ks[5], (1, d_inner), jnp.float32),
        "w2": scale * jax.random.normal(ks[6], (d_inner, d_model), jnp.float32),
        "b2": scale * jax.random.normal(ks[7], (1, d_model), jnp.float32),
        "ln2_g": jnp.ones((1, d_model), jnp.float32),
        "ln2_b": jnp.zeros((1, d_model), jnp.float32),
    }

    enc_input = jax.random.normal(ks[8], (B, L, d_model), jnp.float32)
    # Causal mask exercises the masked_fill path (no fully-masked rows).
    mask = jnp.broadcast_to(jnp.tril(jnp.ones((L, L), jnp.int32)), (B, L, L))

    enc_output, enc_slf_attn = encoder_layer(
        enc_input, params, mask, n_head=n_head, d_k=d_k, d_v=d_v)
    jax.block_until_ready((enc_output, enc_slf_attn))

    assert enc_output.shape == (B, L, d_model)
    assert enc_slf_attn.shape == (B, n_head, L, L)
    attn_f32 = enc_slf_attn.astype(jnp.float32)

    # Tight check against a reference mirroring the kernel's bf16 matmul inputs.
    ref_out_b, ref_attn_b = _reference(enc_input, params, mask, n_head, d_k, d_v,
                                       matmul_dtype=jnp.bfloat16)
    assert jnp.allclose(enc_output, ref_out_b, atol=1e-2, rtol=1e-2)
    assert jnp.allclose(attn_f32, ref_attn_b, atol=2e-2, rtol=2e-2)

    # Loose semantic check against the exact f32 (PyTorch eval-mode) reference.
    ref_out, ref_attn = _reference(enc_input, params, mask, n_head, d_k, d_v,
                                   matmul_dtype=jnp.float32)
    assert jnp.allclose(enc_output, ref_out, atol=1e-1, rtol=1e-1)
    assert jnp.allclose(attn_f32, ref_attn, atol=2e-2, rtol=2e-2)

    print("KERNEL_OK")
</pallas_src>

<mosaic_0001>
module attributes {stable_mosaic.version = 11 : i64} {
  func.func @kernel(%arg0: i32, %arg1: memref<1x8x32xf32, #tpu.memory_space<vmem>>, %arg2: memref<1x8x8xi32, #tpu.memory_space<vmem>>, %arg3: memref<32x32xbf16, #tpu.memory_space<vmem>>, %arg4: memref<32x32xbf16, #tpu.memory_space<vmem>>, %arg5: memref<32x32xbf16, #tpu.memory_space<vmem>>, %arg6: memref<32x32xbf16, #tpu.memory_space<vmem>>, %arg7: memref<1x32xf32, #tpu.memory_space<vmem>>, %arg8: memref<1x32xf32, #tpu.memory_space<vmem>>, %arg9: memref<32x64xbf16, #tpu.memory_space<vmem>>, %arg10: memref<1x64xf32, #tpu.memory_space<vmem>>, %arg11: memref<64x32xbf16, #tpu.memory_space<vmem>>, %arg12: memref<1x32xf32, #tpu.memory_space<vmem>>, %arg13: memref<1x32xf32, #tpu.memory_space<vmem>>, %arg14: memref<1x32xf32, #tpu.memory_space<vmem>>, %arg15: memref<1x8x32xf32, #tpu.memory_space<vmem>>, %arg16: memref<1x2x8x8xbf16, #tpu.memory_space<vmem>>) attributes {dimension_semantics = [#tpu.dimension_semantics<parallel>], iteration_bounds = array<i64: 2>, scalar_prefetch = 0 : i64, scratch_operands = 0 : i64, tpu.core_type = #tpu.core_type<tc>, window_params = [{transform_indices = @transform_0, window_bounds = array<i64: 1, 8, 32>}, {transform_indices = @transform_1, window_bounds = array<i64: 1, 8, 8>}, {pipeline_mode = #tpu.pipeline_mode<synchronous>, transform_indices = @transform_2, window_bounds = array<i64: 32, 32>}, {pipeline_mode = #tpu.pipeline_mode<synchronous>, transform_indices = @transform_3, window_bounds = array<i64: 32, 32>}, {pipeline_mode = #tpu.pipeline_mode<synchronous>, transform_indices = @transform_4, window_bounds = array<i64: 32, 32>}, {pipeline_mode = #tpu.pipeline_mode<synchronous>, transform_indices = @transform_5, window_bounds = array<i64: 32, 32>}, {pipeline_mode = #tpu.pipeline_mode<synchronous>, transform_indices = @transform_6, window_bounds = array<i64: 1, 32>}, {pipeline_mode = #tpu.pipeline_mode<synchronous>, transform_indices = @transform_7, window_bounds = array<i64: 1, 32>}, {pipeline_mode = #tpu.pipeline_mode<synchronous>, transform_indices = @transform_8, window_bounds = array<i64: 32, 64>}, {pipeline_mode = #tpu.pipeline_mode<synchronous>, transform_indices = @transform_9, window_bounds = array<i64: 1, 64>}, {pipeline_mode = #tpu.pipeline_mode<synchronous>, transform_indices = @transform_10, window_bounds = array<i64: 64, 32>}, {pipeline_mode = #tpu.pipeline_mode<synchronous>, transform_indices = @transform_11, window_bounds = array<i64: 1, 32>}, {pipeline_mode = #tpu.pipeline_mode<synchronous>, transform_indices = @transform_12, window_bounds = array<i64: 1, 32>}, {pipeline_mode = #tpu.pipeline_mode<synchronous>, transform_indices = @transform_13, window_bounds = array<i64: 1, 32>}, {transform_indices = @transform_14, window_bounds = array<i64: 1, 8, 32>}, {transform_indices = @transform_15, window_bounds = array<i64: 1, 2, 8, 8>}]} {
    %c0 = arith.constant 0 : index
    %c0_0 = arith.constant 0 : index
    %c0_1 = arith.constant 0 : index
    %0 = vector.load %arg1[%c0, %c0_0, %c0_1] : memref<1x8x32xf32, #tpu.memory_space<vmem>>, vector<1x8x32xf32>
    %1 = vector.shape_cast %0 : vector<1x8x32xf32> to vector<8x32xf32>
    %2 = arith.truncf %1 : vector<8x32xf32> to vector<8x32xbf16>
    %c0_2 = arith.constant 0 : index
    %c0_3 = arith.constant 0 : index
    %c0_4 = arith.constant 0 : index
    %3 = vector.load %arg2[%c0_2, %c0_3, %c0_4] : memref<1x8x8xi32, #tpu.memory_space<vmem>>, vector<1x8x8xi32>
    %c0_i32 = arith.constant 0 : i32
    %4 = vector.broadcast %c0_i32 : i32 to vector<1x8x8xi32>
    %5 = arith.cmpi eq, %3, %4 : vector<1x8x8xi32>
    %cst = arith.constant -1.000000e+09 : f32
    %cst_5 = arith.constant 0.000000e+00 : f32
    %6 = vector.broadcast %cst : f32 to vector<1x8x8xf32>
    %7 = vector.broadcast %cst_5 : f32 to vector<1x8x8xf32>
    %8 = arith.select %5, %6, %7 : vector<1x8x8xi1>, vector<1x8x8xf32>
    %c0_6 = arith.constant 0 : index
    %c0_7 = arith.constant 0 : index
    %9 = vector.load %arg3[%c0_6, %c0_7] : memref<32x32xbf16, #tpu.memory_space<vmem>>, vector<32x32xbf16>
    %cst_8 = arith.constant dense<0.000000e+00> : vector<8x32xf32>
    %10 = tpu.matmul %2, %9, %cst_8 {dimension_numbers = #tpu.dot_dimension_numbers<[1], [0], [0], [1], [0, 0, 1, 1], [], []>} : vector<8x32xbf16>, vector<32x32xbf16>, vector<8x32xf32> -> vector<8x32xf32>
    %11 = arith.truncf %10 : vector<8x32xf32> to vector<8x32xbf16>
    %12 = vector.shape_cast %11 : vector<8x32xbf16> to vector<1x8x32xbf16>
    %c0_9 = arith.constant 0 : index
    %c0_10 = arith.constant 0 : index
    %13 = vector.load %arg4[%c0_9, %c0_10] : memref<32x32xbf16, #tpu.memory_space<vmem>>, vector<32x32xbf16>
    %cst_11 = arith.constant dense<0.000000e+00> : vector<8x32xf32>
    %14 = tpu.matmul %2, %13, %cst_11 {dimension_numbers = #tpu.dot_dimension_numbers<[1], [0], [0], [1], [0, 0, 1, 1], [], []>} : vector<8x32xbf16>, vector<32x32xbf16>, vector<8x32xf32> -> vector<8x32xf32>
    %15 = arith.truncf %14 : vector<8x32xf32> to vector<8x32xbf16>
    %16 = vector.shape_cast %15 : vector<8x32xbf16> to vector<1x8x32xbf16>
    %c0_12 = arith.constant 0 : index
    %c0_13 = arith.constant 0 : index
    %17 = vector.load %arg5[%c0_12, %c0_13] : memref<32x32xbf16, #tpu.memory_space<vmem>>, vector<32x32xbf16>
    %cst_14 = arith.constant dense<0.000000e+00> : vector<8x32xf32>
    %18 = tpu.matmul %2, %17, %cst_14 {dimension_numbers = #tpu.dot_dimension_numbers<[1], [0], [0], [1], [0, 0, 1, 1], [], []>} : vector<8x32xbf16>, vector<32x32xbf16>, vector<8x32xf32> -> vector<8x32xf32>
    %19 = arith.truncf %18 : vector<8x32xf32> to vector<8x32xbf16>
    %20 = vector.shape_cast %19 : vector<8x32xbf16> to vector<1x8x32xbf16>
    %21 = vector.extract_strided_slice %12 {offsets = [0, 0, 0], sizes = [1, 8, 16], strides = [1, 1, 1]} : vector<1x8x32xbf16> to vector<1x8x16xbf16>
    %22 = vector.extract_strided_slice %16 {offsets = [0, 0, 0], sizes = [1, 8, 16], strides = [1, 1, 1]} : vector<1x8x32xbf16> to vector<1x8x16xbf16>
    %23 = vector.extract_strided_slice %20 {offsets = [0, 0, 0], sizes = [1, 8, 16], strides = [1, 1, 1]} : vector<1x8x32xbf16> to vector<1x8x16xbf16>
    "tpu.trace_start"() <{level = 10 : i32, message = "bqd,bkd->bqk"}> : () -> ()
    %cst_15 = arith.constant dense<0.000000e+00> : vector<1x8x8xf32>
    %24 = tpu.matmul %21, %22, %cst_15 {dimension_numbers = #tpu.dot_dimension_numbers<[2], [2], [1], [1], [0, 0, 0, 1, 1, 1], [0], [0]>} : vector<1x8x16xbf16>, vector<1x8x16xbf16>, vector<1x8x8xf32> -> vector<1x8x8xf32>
    "tpu.trace_stop"() : () -> ()
    %25 = arith.addf %24, %8 : vector<1x8x8xf32>
    %cst_16 = arith.constant dense<0xFF800000> : vector<1x8xf32>
    %26 = vector.multi_reduction <maximumf>, %25, %cst_16 [2] : vector<1x8x8xf32> to vector<1x8xf32>
    %27 = vector.shape_cast %26 : vector<1x8xf32> to vector<1x8x1xf32>
    %28 = vector.broadcast %27 : vector<1x8x1xf32> to vector<1x8x8xf32>
    %29 = arith.subf %25, %28 : vector<1x8x8xf32>
    %30 = math.exp %29 : vector<1x8x8xf32>
    %cst_17 = arith.constant dense<0.000000e+00> : vector<1x8xf32>
    %31 = vector.multi_reduction <add>, %30, %cst_17 [2] : vector<1x8x8xf32> to vector<1x8xf32>
    %32 = vector.shape_cast %31 : vector<1x8xf32> to vector<1x8x1xf32>
    %33 = tpu.reciprocal %32 {approx = true} : vector<1x8x1xf32> -> vector<1x8x1xf32>
    %34 = vector.broadcast %33 : vector<1x8x1xf32> to vector<1x8x8xf32>
    %35 = arith.mulf %30, %34 : vector<1x8x8xf32>
    %36 = arith.truncf %35 : vector<1x8x8xf32> to vector<1x8x8xbf16>
    %37 = arith.truncf %35 : vector<1x8x8xf32> to vector<1x8x8xbf16>
    "tpu.trace_start"() <{level = 10 : i32, message = "bqk,bkd->bqd"}> : () -> ()
    %cst_18 = arith.constant dense<0.000000e+00> : vector<1x8x16xf32>
    %38 = tpu.matmul %37, %23, %cst_18 {dimension_numbers = #tpu.dot_dimension_numbers<[2], [1], [1], [2], [0, 0, 0, 1, 1, 2], [0], [0]>} : vector<1x8x8xbf16>, vector<1x8x16xbf16>, vector<1x8x16xf32> -> vector<1x8x16xf32>
    "tpu.trace_stop"() : () -> ()
    %39 = arith.truncf %38 : vector<1x8x16xf32> to vector<1x8x16xbf16>
    %40 = vector.extract_strided_slice %12 {offsets = [0, 0, 16], sizes = [1, 8, 16], strides = [1, 1, 1]} : vector<1x8x32xbf16> to vector<1x8x16xbf16>
    %41 = vector.extract_strided_slice %16 {offsets = [0, 0, 16], sizes = [1, 8, 16], strides = [1, 1, 1]} : vector<1x8x32xbf16> to vector<1x8x16xbf16>
    %42 = vector.extract_strided_slice %20 {offsets = [0, 0, 16], sizes = [1, 8, 16], strides = [1, 1, 1]} : vector<1x8x32xbf16> to vector<1x8x16xbf16>
    "tpu.trace_start"() <{level = 10 : i32, message = "bqd,bkd->bqk"}> : () -> ()
    %cst_19 = arith.constant dense<0.000000e+00> : vector<1x8x8xf32>
    %43 = tpu.matmul %40, %41, %cst_19 {dimension_numbers = #tpu.dot_dimension_numbers<[2], [2], [1], [1], [0, 0, 0, 1, 1, 1], [0], [0]>} : vector<1x8x16xbf16>, vector<1x8x16xbf16>, vector<1x8x8xf32> -> vector<1x8x8xf32>
    "tpu.trace_stop"() : () -> ()
    %44 = arith.addf %43, %8 : vector<1x8x8xf32>
    %cst_20 = arith.constant dense<0xFF800000> : vector<1x8xf32>
    %45 = vector.multi_reduction <maximumf>, %44, %cst_20 [2] : vector<1x8x8xf32> to vector<1x8xf32>
    %46 = vector.shape_cast %45 : vector<1x8xf32> to vector<1x8x1xf32>
    %47 = vector.broadcast %46 : vector<1x8x1xf32> to vector<1x8x8xf32>
    %48 = arith.subf %44, %47 : vector<1x8x8xf32>
    %49 = math.exp %48 : vector<1x8x8xf32>
    %cst_21 = arith.constant dense<0.000000e+00> : vector<1x8xf32>
    %50 = vector.multi_reduction <add>, %49, %cst_21 [2] : vector<1x8x8xf32> to vector<1x8xf32>
    %51 = vector.shape_cast %50 : vector<1x8xf32> to vector<1x8x1xf32>
    %52 = tpu.reciprocal %51 {approx = true} : vector<1x8x1xf32> -> vector<1x8x1xf32>
    %53 = vector.broadcast %52 : vector<1x8x1xf32> to vector<1x8x8xf32>
    %54 = arith.mulf %49, %53 : vector<1x8x8xf32>
    %55 = arith.truncf %54 : vector<1x8x8xf32> to vector<1x8x8xbf16>
    %56 = arith.truncf %54 : vector<1x8x8xf32> to vector<1x8x8xbf16>
    "tpu.trace_start"() <{level = 10 : i32, message = "bqk,bkd->bqd"}> : () -> ()
    %cst_22 = arith.constant dense<0.000000e+00> : vector<1x8x16xf32>
    %57 = tpu.matmul %56, %42, %cst_22 {dimension_numbers = #tpu.dot_dimension_numbers<[2], [1], [1], [2], [0, 0, 0, 1, 1, 2], [0], [0]>} : vector<1x8x8xbf16>, vector<1x8x16xbf16>, vector<1x8x16xf32> -> vector<1x8x16xf32>
    "tpu.trace_stop"() : () -> ()
    %58 = arith.truncf %57 : vector<1x8x16xf32> to vector<1x8x16xbf16>
    %59 = vector.shape_cast %36 : vector<1x8x8xbf16> to vector<1x1x8x8xbf16>
    %60 = vector.shape_cast %55 : vector<1x8x8xbf16> to vector<1x1x8x8xbf16>
    %61 = tpu.concatenate %59, %60 in 1 : vector<1x1x8x8xbf16>, vector<1x1x8x8xbf16> -> vector<1x2x8x8xbf16>
    %c0_23 = arith.constant 0 : index
    %c0_24 = arith.constant 0 : index
    %c0_25 = arith.constant 0 : index
    %c0_26 = arith.constant 0 : index
    %62 = vector.load %arg16[%c0_23, %c0_24, %c0_25, %c0_26] : memref<1x2x8x8xbf16, #tpu.memory_space<vmem>>, vector<1x2x8x8xbf16>
    tpu.vector_store %arg16[%c0_23, %c0_24, %c0_25, %c0_26], %61 {strides = array<i32>} : memref<1x2x8x8xbf16, #tpu.memory_space<vmem>>, vector<1x2x8x8xbf16>,
    %63 = tpu.concatenate %39, %58 in 2 : vector<1x8x16xbf16>, vector<1x8x16xbf16> -> vector<1x8x32xbf16>
    %64 = vector.shape_cast %63 : vector<1x8x32xbf16> to vector<8x32xbf16>
    %c0_27 = arith.constant 0 : index
    %c0_28 = arith.constant 0 : index
    %65 = vector.load %arg6[%c0_27, %c0_28] : memref<32x32xbf16, #tpu.memory_space<vmem>>, vector<32x32xbf16>
    %cst_29 = arith.constant dense<0.000000e+00> : vector<8x32xf32>
    %66 = tpu.matmul %64, %65, %cst_29 {dimension_numbers = #tpu.dot_dimension_numbers<[1], [0], [0], [1], [0, 0, 1, 1], [], []>} : vector<8x32xbf16>, vector<32x32xbf16>, vector<8x32xf32> -> vector<8x32xf32>
    %67 = arith.addf %66, %1 : vector<8x32xf32>
    %cst_30 = arith.constant dense<0.000000e+00> : vector<8xf32>
    %68 = vector.multi_reduction <add>, %67, %cst_30 [1] : vector<8x32xf32> to vector<8xf32>
    %69 = vector.shape_cast %68 : vector<8xf32> to vector<8x1xf32>
    %cst_31 = arith.constant 3.200000e+01 : f32
    %70 = vector.broadcast %cst_31 : f32 to vector<8x1xf32>
    %71 = arith.divf %69, %70 : vector<8x1xf32>
    %72 = vector.broadcast %71 : vector<8x1xf32> to vector<8x32xf32>
    %73 = arith.subf %67, %72 : vector<8x32xf32>
    %74 = arith.mulf %73, %73 : vector<8x32xf32>
    %cst_32 = arith.constant dense<0.000000e+00> : vector<8xf32>
    %75 = vector.multi_reduction <add>, %74, %cst_32 [1] : vector<8x32xf32> to vector<8xf32>
    %76 = vector.shape_cast %75 : vector<8xf32> to vector<8x1xf32>
    %cst_33 = arith.constant 3.200000e+01 : f32
    %77 = vector.broadcast %cst_33 : f32 to vector<8x1xf32>
    %78 = arith.divf %76, %77 : vector<8x1xf32>
    %79 = vector.broadcast %71 : vector<8x1xf32> to vector<8x32xf32>
    %80 = arith.subf %67, %79 : vector<8x32xf32>
    %cst_34 = arith.constant 9.99999997E-7 : f32
    %81 = vector.broadcast %cst_34 : f32 to vector<8x1xf32>
    %82 = arith.addf %78, %81 : vector<8x1xf32>
    %83 = math.rsqrt %82 : vector<8x1xf32>
    %84 = vector.broadcast %83 : vector<8x1xf32> to vector<8x32xf32>
    %85 = arith.mulf %80, %84 : vector<8x32xf32>
    %c0_35 = arith.constant 0 : index
    %c0_36 = arith.constant 0 : index
    %86 = vector.load %arg7[%c0_35, %c0_36] : memref<1x32xf32, #tpu.memory_space<vmem>>, vector<1x32xf32>
    %87 = vector.broadcast %86 : vector<1x32xf32> to vector<8x32xf32>
    %88 = arith.mulf %85, %87 : vector<8x32xf32>
    %c0_37 = arith.constant 0 : index
    %c0_38 = arith.constant 0 : index
    %89 = vector.load %arg8[%c0_37, %c0_38] : memref<1x32xf32, #tpu.memory_space<vmem>>, vector<1x32xf32>
    %90 = vector.broadcast %89 : vector<1x32xf32> to vector<8x32xf32>
    %91 = arith.addf %88, %90 : vector<8x32xf32>
    %92 = arith.truncf %91 : vector<8x32xf32> to vector<8x32xbf16>
    %c0_39 = arith.constant 0 : index
    %c0_40 = arith.constant 0 : index
    %93 = vector.load %arg9[%c0_39, %c0_40] : memref<32x64xbf16, #tpu.memory_space<vmem>>, vector<32x64xbf16>
    %cst_41 = arith.constant dense<0.000000e+00> : vector<8x64xf32>
    %94 = tpu.matmul %92, %93, %cst_41 {dimension_numbers = #tpu.dot_dimension_numbers<[1], [0], [0], [1], [0, 0, 1, 1], [], []>} : vector<8x32xbf16>, vector<32x64xbf16>, vector<8x64xf32> -> vector<8x64xf32>
    %c0_42 = arith.constant 0 : index
    %c0_43 = arith.constant 0 : index
    %95 = vector.load %arg10[%c0_42, %c0_43] : memref<1x64xf32, #tpu.memory_space<vmem>>, vector<1x64xf32>
    %96 = vector.broadcast %95 : vector<1x64xf32> to vector<8x64xf32>
    %97 = arith.addf %94, %96 : vector<8x64xf32>
    %cst_44 = arith.constant 0.000000e+00 : f32
    %98 = vector.broadcast %cst_44 : f32 to vector<8x64xf32>
    %99 = arith.maximumf %97, %98 : vector<8x64xf32>
    %100 = arith.truncf %99 : vector<8x64xf32> to vector<8x64xbf16>
    %c0_45 = arith.constant 0 : index
    %c0_46 = arith.constant 0 : index
    %101 = vector.load %arg11[%c0_45, %c0_46] : memref<64x32xbf16, #tpu.memory_space<vmem>>, vector<64x32xbf16>
    %cst_47 = arith.constant dense<0.000000e+00> : vector<8x32xf32>
    %102 = tpu.matmul %100, %101, %cst_47 {dimension_numbers = #tpu.dot_dimension_numbers<[1], [0], [0], [1], [0, 0, 1, 1], [], []>} : vector<8x64xbf16>, vector<64x32xbf16>, vector<8x32xf32> -> vector<8x32xf32>
    %c0_48 = arith.constant 0 : index
    %c0_49 = arith.constant 0 : index
    %103 = vector.load %arg12[%c0_48, %c0_49] : memref<1x32xf32, #tpu.memory_space<vmem>>, vector<1x32xf32>
    %104 = vector.broadcast %103 : vector<1x32xf32> to vector<8x32xf32>
    %105 = arith.addf %102, %104 : vector<8x32xf32>
    %106 = arith.addf %105, %91 : vector<8x32xf32>
    %cst_50 = arith.constant dense<0.000000e+00> : vector<8xf32>
    %107 = vector.multi_reduction <add>, %106, %cst_50 [1] : vector<8x32xf32> to vector<8xf32>
    %108 = vector.shape_cast %107 : vector<8xf32> to vector<8x1xf32>
    %cst_51 = arith.constant 3.200000e+01 : f32
    %109 = vector.broadcast %cst_51 : f32 to vector<8x1xf32>
    %110 = arith.divf %108, %109 : vector<8x1xf32>
    %111 = vector.broadcast %110 : vector<8x1xf32> to vector<8x32xf32>
    %112 = arith.subf %106, %111 : vector<8x32xf32>
    %113 = arith.mulf %112, %112 : vector<8x32xf32>
    %cst_52 = arith.constant dense<0.000000e+00> : vector<8xf32>
    %114 = vector.multi_reduction <add>, %113, %cst_52 [1] : vector<8x32xf32> to vector<8xf32>
    %115 = vector.shape_cast %114 : vector<8xf32> to vector<8x1xf32>
    %cst_53 = arith.constant 3.200000e+01 : f32
    %116 = vector.broadcast %cst_53 : f32 to vector<8x1xf32>
    %117 = arith.divf %115, %116 : vector<8x1xf32>
    %118 = vector.broadcast %110 : vector<8x1xf32> to vector<8x32xf32>
    %119 = arith.subf %106, %118 : vector<8x32xf32>
    %cst_54 = arith.constant 9.99999997E-7 : f32
    %120 = vector.broadcast %cst_54 : f32 to vector<8x1xf32>
    %121 = arith.addf %117, %120 : vector<8x1xf32>
    %122 = math.rsqrt %121 : vector<8x1xf32>
    %123 = vector.broadcast %122 : vector<8x1xf32> to vector<8x32xf32>
    %124 = arith.mulf %119, %123 : vector<8x32xf32>
    %c0_55 = arith.constant 0 : index
    %c0_56 = arith.constant 0 : index
    %125 = vector.load %arg13[%c0_55, %c0_56] : memref<1x32xf32, #tpu.memory_space<vmem>>, vector<1x32xf32>
    %126 = vector.broadcast %125 : vector<1x32xf32> to vector<8x32xf32>
    %127 = arith.mulf %124, %126 : vector<8x32xf32>
    %c0_57 = arith.constant 0 : index
    %c0_58 = arith.constant 0 : index
    %128 = vector.load %arg14[%c0_57, %c0_58] : memref<1x32xf32, #tpu.memory_space<vmem>>, vector<1x32xf32>
    %129 = vector.broadcast %128 : vector<1x32xf32> to vector<8x32xf32>
    %130 = arith.addf %127, %129 : vector<8x32xf32>
    %131 = vector.shape_cast %130 : vector<8x32xf32> to vector<1x8x32xf32>
    %c0_59 = arith.constant 0 : index
    %c0_60 = arith.constant 0 : index
    %c0_61 = arith.constant 0 : index
    %132 = vector.load %arg15[%c0_59, %c0_60, %c0_61] : memref<1x8x32xf32, #tpu.memory_space<vmem>>, vector<1x8x32xf32>
    tpu.vector_store %arg15[%c0_59, %c0_60, %c0_61], %131 {strides = array<i32>} : memref<1x8x32xf32, #tpu.memory_space<vmem>>, vector<1x8x32xf32>,
    return
  }
  func.func @transform_0(%arg0: i32) -> (i32, i32, i32) {
    %c0_i32 = arith.constant 0 : i32
    %c0_i32_0 = arith.constant 0 : i32
    %c0_i32_1 = arith.constant 0 : i32
    return %arg0, %c0_i32, %c0_i32_0 : i32, i32, i32
  }
  func.func @transform_1(%arg0: i32) -> (i32, i32, i32) {
    %c0_i32 = arith.constant 0 : i32
    %c0_i32_0 = arith.constant 0 : i32
    %c0_i32_1 = arith.constant 0 : i32
    return %arg0, %c0_i32, %c0_i32_0 : i32, i32, i32
  }
  func.func @transform_2(%arg0: i32) -> (i32, i32) {
    %c0_i32 = arith.constant 0 : i32
    %c0_i32_0 = arith.constant 0 : i32
    %c0_i32_1 = arith.constant 0 : i32
    return %c0_i32, %c0_i32_0 : i32, i32
  }
  func.func @transform_3(%arg0: i32) -> (i32, i32) {
    %c0_i32 = arith.constant 0 : i32
    %c0_i32_0 = arith.constant 0 : i32
    %c0_i32_1 = arith.constant 0 : i32
    return %c0_i32, %c0_i32_0 : i32, i32
  }
  func.func @transform_4(%arg0: i32) -> (i32, i32) {
    %c0_i32 = arith.constant 0 : i32
    %c0_i32_0 = arith.constant 0 : i32
    %c0_i32_1 = arith.constant 0 : i32
    return %c0_i32, %c0_i32_0 : i32, i32
  }
  func.func @transform_5(%arg0: i32) -> (i32, i32) {
    %c0_i32 = arith.constant 0 : i32
    %c0_i32_0 = arith.constant 0 : i32
    %c0_i32_1 = arith.constant 0 : i32
    return %c0_i32, %c0_i32_0 : i32, i32
  }
  func.func @transform_6(%arg0: i32) -> (i32, i32) {
    %c0_i32 = arith.constant 0 : i32
    %c0_i32_0 = arith.constant 0 : i32
    %c0_i32_1 = arith.constant 0 : i32
    return %c0_i32, %c0_i32_0 : i32, i32
  }
  func.func @transform_7(%arg0: i32) -> (i32, i32) {
    %c0_i32 = arith.constant 0 : i32
    %c0_i32_0 = arith.constant 0 : i32
    %c0_i32_1 = arith.constant 0 : i32
    return %c0_i32, %c0_i32_0 : i32, i32
  }
  func.func @transform_8(%arg0: i32) -> (i32, i32) {
    %c0_i32 = arith.constant 0 : i32
    %c0_i32_0 = arith.constant 0 : i32
    %c0_i32_1 = arith.constant 0 : i32
    return %c0_i32, %c0_i32_0 : i32, i32
  }
  func.func @transform_9(%arg0: i32) -> (i32, i32) {
    %c0_i32 = arith.constant 0 : i32
    %c0_i32_0 = arith.constant 0 : i32
    %c0_i32_1 = arith.constant 0 : i32
    return %c0_i32, %c0_i32_0 : i32, i32
  }
  func.func @transform_10(%arg0: i32) -> (i32, i32) {
    %c0_i32 = arith.constant 0 : i32
    %c0_i32_0 = arith.constant 0 : i32
    %c0_i32_1 = arith.constant 0 : i32
    return %c0_i32, %c0_i32_0 : i32, i32
  }
  func.func @transform_11(%arg0: i32) -> (i32, i32) {
    %c0_i32 = arith.constant 0 : i32
    %c0_i32_0 = arith.constant 0 : i32
    %c0_i32_1 = arith.constant 0 : i32
    return %c0_i32, %c0_i32_0 : i32, i32
  }
  func.func @transform_12(%arg0: i32) -> (i32, i32) {
    %c0_i32 = arith.constant 0 : i32
    %c0_i32_0 = arith.constant 0 : i32
    %c0_i32_1 = arith.constant 0 : i32
    return %c0_i32, %c0_i32_0 : i32, i32
  }
  func.func @transform_13(%arg0: i32) -> (i32, i32) {
    %c0_i32 = arith.constant 0 : i32
    %c0_i32_0 = arith.constant 0 : i32
    %c0_i32_1 = arith.constant 0 : i32
    return %c0_i32, %c0_i32_0 : i32, i32
  }
  func.func @transform_14(%arg0: i32) -> (i32, i32, i32) {
    %c0_i32 = arith.constant 0 : i32
    %c0_i32_0 = arith.constant 0 : i32
    %c0_i32_1 = arith.constant 0 : i32
    return %arg0, %c0_i32, %c0_i32_0 : i32, i32, i32
  }
  func.func @transform_15(%arg0: i32) -> (i32, i32, i32, i32) {
    %c0_i32 = arith.constant 0 : i32
    %c0_i32_0 = arith.constant 0 : i32
    %c0_i32_1 = arith.constant 0 : i32
    %c0_i32_2 = arith.constant 0 : i32
    return %arg0, %c0_i32, %c0_i32_0, %c0_i32_1 : i32, i32, i32, i32
  }
}

</mosaic_0001>

<llo_original>
// kernel: encoder_layer.1
$region0: #{encoder_layer.1}
  #allocation0 [shape = 'u32[]', space=smem, size = 0x4, offset = 0x4, fixed_abs, tag = 'smem constant byte address 0x4 - core index']
  #allocation1 [shape = 'u32[144,128]{1,0:T(1,128)}', space=vmem, size = 0x12000, scoped, tag = 'internal scratch']
  %s0 = inlined_call_operand.vmem [shape: f32[2,8,32], index: 0, kind: input, shape index: {}]
  %s1 = inlined_call_operand.vmem [shape: s32[2,8,8], index: 1, kind: input, shape index: {}]
  %s2 = inlined_call_operand.vmem [shape: bf16[32,32], index: 2, kind: input, shape index: {}]
  %s3 = inlined_call_operand.vmem [shape: bf16[32,32], index: 3, kind: input, shape index: {}]
  %s4 = inlined_call_operand.vmem [shape: bf16[32,32], index: 4, kind: input, shape index: {}]
  %s5 = inlined_call_operand.vmem [shape: bf16[32,32], index: 5, kind: input, shape index: {}]
  %s6 = inlined_call_operand.vmem [shape: f32[1,32], index: 6, kind: input, shape index: {}]
  %s7 = inlined_call_operand.vmem [shape: f32[1,32], index: 7, kind: input, shape index: {}]
  %s8 = inlined_call_operand.vmem [shape: bf16[32,64], index: 8, kind: input, shape index: {}]
  %s9 = inlined_call_operand.vmem [shape: f32[1,64], index: 9, kind: input, shape index: {}]
  %s10 = inlined_call_operand.vmem [shape: bf16[64,32], index: 10, kind: input, shape index: {}]
  %s11 = inlined_call_operand.vmem [shape: f32[1,32], index: 11, kind: input, shape index: {}]
  %s12 = inlined_call_operand.vmem [shape: f32[1,32], index: 12, kind: input, shape index: {}]
  %s13 = inlined_call_operand.vmem [shape: f32[1,32], index: 13, kind: input, shape index: {}]
  %s14 = inlined_call_operand.hbm [shape: f32[2,8,32], index: 14, kind: output, shape index: {0}]
  %s15 = inlined_call_operand.hbm [shape: bf16[2,2,8,8], index: 15, kind: output, shape index: {1}]
  %16 = xla_tuple %s14, %s15
  %s17 = sld [smem:[#allocation0]]
  $region97: #{encoder_layer.1} parent=0
    _
  %s19 = ssub.s32 1, %s17
  %s20 = scalar_select 0, %s19, %s17
  $region1: #{encoder_layer.1} parent=0
    #allocation2 [shape = 'u8[8192]{0}', space=vmem, size = 0x2000, scoped, tag = 'output window, operand 0']
    #allocation3 [shape = 's32[2]{0}', space=sflag, size = 0x8, scoped, tag = 'scoped memory for encoder_layer.1']
    #allocation4 [shape = 'u8[8192]{0}', space=vmem, size = 0x2000, scoped, tag = 'output window, operand 1']
    #allocation5 [shape = 's32[2]{0}', space=sflag, size = 0x8, scoped, tag = 'scoped memory for encoder_layer.1']
    %21 = vsyncpa [#allocation3], 0
    %s22 = scalar_lea.sflag [#allocation3], 1
    %23 = vsyncpa %s22, 0
    %24 = vsyncpa [#allocation5], 0
    %s25 = scalar_lea.sflag [#allocation5], 1
    %26 = vsyncpa %s25, 0
    loop: start=0, step=1, limit=4
    $region2: #{encoder_layer.1} parent=1 // loop_pre_header
      _
    $region3: #{encoder_layer.1} parent=1 // loop_header
      %s28 = sphi 0, %s32
      %p29 = scmp.ge.s32.totalorder %s28, 4
      %s38 = sphi 0, %s40
      %s41 = sphi 0, %s38
      %s42 = sphi 0, %s41
      %s58 = sphi 0, %s42
      %s64 = sphi 0, %s66
      %s67 = sphi 0, %s64
      %s68 = sphi 0, %s67
      %s84 = sphi 0, %s68
      %s88 = sphi 0, %s88
      %s90 = sphi 0, %s88
      %s91 = sphi 0, %s90
      %s105 = sphi 0, %s91
      %s109 = sphi 0, %s109
      %s111 = sphi 0, %s109
      %s112 = sphi 0, %s111
      %s126 = sphi 0, %s112
      %s130 = sphi 0, %s130
      %s132 = sphi 0, %s130
      %s133 = sphi 0, %s132
      %s147 = sphi 0, %s133
      %s151 = sphi 0, %s151
      %s153 = sphi 0, %s151
      %s154 = sphi 0, %s153
      %s168 = sphi 0, %s154
      %s172 = sphi 0, %s172
      %s174 = sphi 0, %s172
      %s175 = sphi 0, %s174
      %s189 = sphi 0, %s175
      %s193 = sphi 0, %s193
      %s195 = sphi 0, %s193
      %s196 = sphi 0, %s195
      %s210 = sphi 0, %s196
      %s214 = sphi 0, %s214
      %s216 = sphi 0, %s214
      %s217 = sphi 0, %s216
      %s231 = sphi 0, %s217
      %s235 = sphi 0, %s235
      %s237 = sphi 0, %s235
      %s238 = sphi 0, %s237
      %s252 = sphi 0, %s238
      %s256 = sphi 0, %s256
      %s258 = sphi 0, %s256
      %s259 = sphi 0, %s258
      %s273 = sphi 0, %s259
      %s277 = sphi 0, %s277
      %s279 = sphi 0, %s277
      %s280 = sphi 0, %s279
      %s294 = sphi 0, %s280
      %s298 = sphi 0, %s298
      %s300 = sphi 0, %s298
      %s301 = sphi 0, %s300
      %s315 = sphi 0, %s301
      %s319 = sphi 0, %s319
      %s321 = sphi 0, %s319
      %s322 = sphi 0, %s321
      %s336 = sphi 0, %s322
      %s342 = sphi 0, %s344
      %s345 = sphi 0, %s342
      %s346 = sphi 0, %s345
      %s362 = sphi 0, %s346
      %s368 = sphi 0, %s370
      %s371 = sphi 0, %s368
      %s372 = sphi 0, %s371
      %s388 = sphi 0, %s372
    $region4: #{encoder_layer.1} parent=1 // loop_header_branch
      %31 = sbr.rel (%p29) target = $region8
    $region5: #{encoder_layer.1} parent=1 // loop_body
      %s33 = ssub.s32 %s28, 1
      %s34 = ssub.s32 %s28, 2
      %s35 = sadd.s32 %s28, 1
      %s36 = ssub.s32 %s28, %s35
      %p37 = scmp.eq.s32.totalorder %s36, 0
      %s39 = sadd.s32 %s38, 1
      %s40 = scalar_select %p37, %s38, %s39
      %p43 = pneg %p37
      %p44 = scmp.eq.s32.totalorder %s28, 1
      %p45 = por %p43, %p44
      %p46 = scmp.ne.s32.totalorder %s38, %s41
      %p47 = scmp.eq.s32.totalorder %s28, 0
      %p48 = por %p46, %p47
      %p49 = scmp.ne.s32.totalorder %s38, %s41
      %p50 = scmp.eq.s32.totalorder %s33, 1
      %p51 = por %p49, %p50
      %p52 = scmp.ne.s32.totalorder %s41, %s42
      %p53 = scmp.eq.s32.totalorder %s33, 0
      %p54 = por %p52, %p53
      %p55 = scmp.ne.s32.totalorder %s41, %s42
      %p56 = scmp.eq.s32.totalorder %s34, 1
      %p57 = por %p55, %p56
      %p59 = scmp.ne.s32.totalorder %s42, %s58
      %p60 = scmp.eq.s32.totalorder %s34, 0
      %p61 = por %p59, %p60
      %s62 = ssub.s32 %s28, %s35
      %p63 = scmp.eq.s32.totalorder %s62, 0
      %s65 = sadd.s32 %s64, 1
      %s66 = scalar_select %p63, %s64, %s65
      %p69 = pneg %p63
      %p70 = scmp.eq.s32.totalorder %s28, 1
      %p71 = por %p69, %p70
      %p72 = scmp.ne.s32.totalorder %s64, %s67
      %p73 = scmp.eq.s32.totalorder %s28, 0
      %p74 = por %p72, %p73
      %p75 = scmp.ne.s32.totalorder %s64, %s67
      %p76 = scmp.eq.s32.totalorder %s33, 1
      %p77 = por %p75, %p76
      %p78 = scmp.ne.s32.totalorder %s67, %s68
      %p79 = scmp.eq.s32.totalorder %s33, 0
      %p80 = por %p78, %p79
      %p81 = scmp.ne.s32.totalorder %s67, %s68
      %p82 = scmp.eq.s32.totalorder %s34, 1
      %p83 = por %p81, %p82
      %p85 = scmp.ne.s32.totalorder %s68, %s84
      %p86 = scmp.eq.s32.totalorder %s34, 0
      %p87 = por %p85, %p86
      %s89 = sadd.s32 %s88, 1
      %p92 = scmp.eq.s32.totalorder %s28, 1
      %p93 = scmp.ne.s32.totalorder %s88, %s90
      %p94 = scmp.eq.s32.totalorder %s28, 0
      %p95 = por %p93, %p94
      %p96 = scmp.ne.s32.totalorder %s88, %s90
      %p97 = scmp.eq.s32.totalorder %s33, 1
      %p98 = por %p96, %p97
      %p99 = scmp.ne.s32.totalorder %s90, %s91
      %p100 = scmp.eq.s32.totalorder %s33, 0
      %p101 = por %p99, %p100
      %p102 = scmp.ne.s32.totalorder %s90, %s91
      %p103 = scmp.eq.s32.totalorder %s34, 1
      %p104 = por %p102, %p103
      %p106 = scmp.ne.s32.totalorder %s91, %s105
      %p107 = scmp.eq.s32.totalorder %s34, 0
      %p108 = por %p106, %p107
      %s110 = sadd.s32 %s109, 1
      %p113 = scmp.eq.s32.totalorder %s28, 1
      %p114 = scmp.ne.s32.totalorder %s109, %s111
      %p115 = scmp.eq.s32.totalorder %s28, 0
      %p116 = por %p114, %p115
      %p117 = scmp.ne.s32.totalorder %s109, %s111
      %p118 = scmp.eq.s32.totalorder %s33, 1
      %p119 = por %p117, %p118
      %p120 = scmp.ne.s32.totalorder %s111, %s112
      %p121 = scmp.eq.s32.totalorder %s33, 0
      %p122 = por %p120, %p121
      %p123 = scmp.ne.s32.totalorder %s111, %s112
      %p124 = scmp.eq.s32.totalorder %s34, 1
      %p125 = por %p123, %p124
      %p127 = scmp.ne.s32.totalorder %s112, %s126
      %p128 = scmp.eq.s32.totalorder %s34, 0
      %p129 = por %p127, %p128
      %s131 = sadd.s32 %s130, 1
      %p134 = scmp.eq.s32.totalorder %s28, 1
      %p135 = scmp.ne.s32.totalorder %s130, %s132
      %p136 = scmp.eq.s32.totalorder %s28, 0
      %p137 = por %p135, %p136
      %p138 = scmp.ne.s32.totalorder %s130, %s132
      %p139 = scmp.eq.s32.totalorder %s33, 1
      %p140 = por %p138, %p139
      %p141 = scmp.ne.s32.totalorder %s132, %s133
      %p142 = scmp.eq.s32.totalorder %s33, 0
      %p143 = por %p141, %p142
      %p144 = scmp.ne.s32.totalorder %s132, %s133
      %p145 = scmp.eq.s32.totalorder %s34, 1
      %p146 = por %p144, %p145
      %p148 = scmp.ne.s32.totalorder %s133, %s147
      %p149 = scmp.eq.s32.totalorder %s34, 0
      %p150 = por %p148, %p149
      %s152 = sadd.s32 %s151, 1
      %p155 = scmp.eq.s32.totalorder %s28, 1
      %p156 = scmp.ne.s32.totalorder %s151, %s153
      %p157 = scmp.eq.s32.totalorder %s28, 0
      %p158 = por %p156, %p157
      %p159 = scmp.ne.s32.totalorder %s151, %s153
      %p160 = scmp.eq.s32.totalorder %s33, 1
      %p161 = por %p159, %p160
      %p162 = scmp.ne.s32.totalorder %s153, %s154
      %p163 = scmp.eq.s32.totalorder %s33, 0
      %p164 = por %p162, %p163
      %p165 = scmp.ne.s32.totalorder %s153, %s154
      %p166 = scmp.eq.s32.totalorder %s34, 1
      %p167 = por %p165, %p166
      %p169 = scmp.ne.s32.totalorder %s154, %s168
      %p170 = scmp.eq.s32.totalorder %s34, 0
      %p171 = por %p169, %p170
      %s173 = sadd.s32 %s172, 1
      %p176 = scmp.eq.s32.totalorder %s28, 1
      %p177 = scmp.ne.s32.totalorder %s172, %s174
      %p178 = scmp.eq.s32.totalorder %s28, 0
      %p179 = por %p177, %p178
      %p180 = scmp.ne.s32.totalorder %s172, %s174
      %p181 = scmp.eq.s32.totalorder %s33, 1
      %p182 = por %p180, %p181
      %p183 = scmp.ne.s32.totalorder %s174, %s175
      %p184 = scmp.eq.s32.totalorder %s33, 0
      %p185 = por %p183, %p184
      %p186 = scmp.ne.s32.totalorder %s174, %s175
      %p187 = scmp.eq.s32.totalorder %s34, 1
      %p188 = por %p186, %p187
      %p190 = scmp.ne.s32.totalorder %s175, %s189
      %p191 = scmp.eq.s32.totalorder %s34, 0
      %p192 = por %p190, %p191
      %s194 = sadd.s32 %s193, 1
      %p197 = scmp.eq.s32.totalorder %s28, 1
      %p198 = scmp.ne.s32.totalorder %s193, %s195
      %p199 = scmp.eq.s32.totalorder %s28, 0
      %p200 = por %p198, %p199
      %p201 = scmp.ne.s32.totalorder %s193, %s195
      %p202 = scmp.eq.s32.totalorder %s33, 1
      %p203 = por %p201, %p202
      %p204 = scmp.ne.s32.totalorder %s195, %s196
      %p205 = scmp.eq.s32.totalorder %s33, 0
      %p206 = por %p204, %p205
      %p207 = scmp.ne.s32.totalorder %s195, %s196
      %p208 = scmp.eq.s32.totalorder %s34, 1
      %p209 = por %p207, %p208
      %p211 = scmp.ne.s32.totalorder %s196, %s210
      %p212 = scmp.eq.s32.totalorder %s34, 0
      %p213 = por %p211, %p212
      %s215 = sadd.s32 %s214, 1
      %p218 = scmp.eq.s32.totalorder %s28, 1
      %p219 = scmp.ne.s32.totalorder %s214, %s216
      %p220 = scmp.eq.s32.totalorder %s28, 0
      %p221 = por %p219, %p220
      %p222 = scmp.ne.s32.totalorder %s214, %s216
      %p223 = scmp.eq.s32.totalorder %s33, 1
      %p224 = por %p222, %p223
      %p225 = scmp.ne.s32.totalorder %s216, %s217
      %p226 = scmp.eq.s32.totalorder %s33, 0
      %p227 = por %p225, %p226
      %p228 = scmp.ne.s32.totalorder %s216, %s217
      %p229 = scmp.eq.s32.totalorder %s34, 1
      %p230 = por %p228, %p229
      %p232 = scmp.ne.s32.totalorder %s217, %s231
      %p233 = scmp.eq.s32.totalorder %s34, 0
      %p234 = por %p232, %p233
      %s236 = sadd.s32 %s235, 1
      %p239 = scmp.eq.s32.totalorder %s28, 1
      %p240 = scmp.ne.s32.totalorder %s235, %s237
      %p241 = scmp.eq.s32.totalorder %s28, 0
      %p242 = por %p240, %p241
      %p243 = scmp.ne.s32.totalorder %s235, %s237
      %p244 = scmp.eq.s32.totalorder %s33, 1
      %p245 = por %p243, %p244
      %p246 = scmp.ne.s32.totalorder %s237, %s238
      %p247 = scmp.eq.s32.totalorder %s33, 0
      %p248 = por %p246, %p247
      %p249 = scmp.ne.s32.totalorder %s237, %s238
      %p250 = scmp.eq.s32.totalorder %s34, 1
      %p251 = por %p249, %p250
      %p253 = scmp.ne.s32.totalorder %s238, %s252
      %p254 = scmp.eq.s32.totalorder %s34, 0
      %p255 = por %p253, %p254
      %s257 = sadd.s32 %s256, 1
      %p260 = scmp.eq.s32.totalorder %s28, 1
      %p261 = scmp.ne.s32.totalorder %s256, %s258
      %p262 = scmp.eq.s32.totalorder %s28, 0
      %p263 = por %p261, %p262
      %p264 = scmp.ne.s32.totalorder %s256, %s258
      %p265 = scmp.eq.s32.totalorder %s33, 1
      %p266 = por %p264, %p265
      %p267 = scmp.ne.s32.totalorder %s258, %s259
      %p268 = scmp.eq.s32.totalorder %s33, 0
      %p269 = por %p267, %p268
      %p270 = scmp.ne.s32.totalorder %s258, %s259
      %p271 = scmp.eq.s32.totalorder %s34, 1
      %p272 = por %p270, %p271
      %p274 = scmp.ne.s32.totalorder %s259, %s273
      %p275 = scmp.eq.s32.totalorder %s34, 0
      %p276 = por %p274, %p275
      %s278 = sadd.s32 %s277, 1
      %p281 = scmp.eq.s32.totalorder %s28, 1
      %p282 = scmp.ne.s32.totalorder %s277, %s279
      %p283 = scmp.eq.s32.totalorder %s28, 0
      %p284 = por %p282, %p283
      %p285 = scmp.ne.s32.totalorder %s277, %s279
      %p286 = scmp.eq.s32.totalorder %s33, 1
      %p287 = por %p285, %p286
      %p288 = scmp.ne.s32.totalorder %s279, %s280
      %p289 = scmp.eq.s32.totalorder %s33, 0
      %p290 = por %p288, %p289
      %p291 = scmp.ne.s32.totalorder %s279, %s280
      %p292 = scmp.eq.s32.totalorder %s34, 1
      %p293 = por %p291, %p292
      %p295 = scmp.ne.s32.totalorder %s280, %s294
      %p296 = scmp.eq.s32.totalorder %s34, 0
      %p297 = por %p295, %p296
      %s299 = sadd.s32 %s298, 1
      %p302 = scmp.eq.s32.totalorder %s28, 1
      %p303 = scmp.ne.s32.totalorder %s298, %s300
      %p304 = scmp.eq.s32.totalorder %s28, 0
      %p305 = por %p303, %p304
      %p306 = scmp.ne.s32.totalorder %s298, %s300
      %p307 = scmp.eq.s32.totalorder %s33, 1
      %p308 = por %p306, %p307
      %p309 = scmp.ne.s32.totalorder %s300, %s301
      %p310 = scmp.eq.s32.totalorder %s33, 0
      %p311 = por %p309, %p310
      %p312 = scmp.ne.s32.totalorder %s300, %s301
      %p313 = scmp.eq.s32.totalorder %s34, 1
      %p314 = por %p312, %p313
      %p316 = scmp.ne.s32.totalorder %s301, %s315
      %p317 = scmp.eq.s32.totalorder %s34, 0
      %p318 = por %p316, %p317
      %s320 = sadd.s32 %s319, 1
      %p323 = scmp.eq.s32.totalorder %s28, 1
      %p324 = scmp.ne.s32.totalorder %s319, %s321
      %p325 = scmp.eq.s32.totalorder %s28, 0
      %p326 = por %p324, %p325
      %p327 = scmp.ne.s32.totalorder %s319, %s321
      %p328 = scmp.eq.s32.totalorder %s33, 1
      %p329 = por %p327, %p328
      %p330 = scmp.ne.s32.totalorder %s321, %s322
      %p331 = scmp.eq.s32.totalorder %s33, 0
      %p332 = por %p330, %p331
      %p333 = scmp.ne.s32.totalorder %s321, %s322
      %p334 = scmp.eq.s32.totalorder %s34, 1
      %p335 = por %p333, %p334
      %p337 = scmp.ne.s32.totalorder %s322, %s336
      %p338 = scmp.eq.s32.totalorder %s34, 0
      %p339 = por %p337, %p338
      %s340 = ssub.s32 %s28, %s35
      %p341 = scmp.eq.s32.totalorder %s340, 0
      %s343 = sadd.s32 %s342, 1
      %s344 = scalar_select %p341, %s342, %s343
      %p347 = pneg %p341
      %p348 = scmp.eq.s32.totalorder %s28, 1
      %p349 = por %p347, %p348
      %p350 = scmp.ne.s32.totalorder %s342, %s345
      %p351 = scmp.eq.s32.totalorder %s28, 0
      %p352 = por %p350, %p351
      %p353 = scmp.ne.s32.totalorder %s342, %s345
      %p354 = scmp.eq.s32.totalorder %s33, 1
      %p355 = por %p353, %p354
      %p356 = scmp.ne.s32.totalorder %s345, %s346
      %p357 = scmp.eq.s32.totalorder %s33, 0
      %p358 = por %p356, %p357
      %p359 = scmp.ne.s32.totalorder %s345, %s346
      %p360 = scmp.eq.s32.totalorder %s34, 1
      %p361 = por %p359, %p360
      %p363 = scmp.ne.s32.totalorder %s346, %s362
      %p364 = scmp.eq.s32.totalorder %s34, 0
      %p365 = por %p363, %p364
      %s366 = ssub.s32 %s28, %s35
      %p367 = scmp.eq.s32.totalorder %s366, 0
      %s369 = sadd.s32 %s368, 1
      %s370 = scalar_select %p367, %s368, %s369
      %p373 = pneg %p367
      %p374 = scmp.eq.s32.totalorder %s28, 1
      %p375 = por %p373, %p374
      %p376 = scmp.ne.s32.totalorder %s368, %s371
      %p377 = scmp.eq.s32.totalorder %s28, 0
      %p378 = por %p376, %p377
      %p379 = scmp.ne.s32.totalorder %s368, %s371
      %p380 = scmp.eq.s32.totalorder %s33, 1
      %p381 = por %p379, %p380
      %p382 = scmp.ne.s32.totalorder %s371, %s372
      %p383 = scmp.eq.s32.totalorder %s33, 0
      %p384 = por %p382, %p383
      %p385 = scmp.ne.s32.totalorder %s371, %s372
      %p386 = scmp.eq.s32.totalorder %s34, 1
      %p387 = por %p385, %p386
      %p389 = scmp.ne.s32.totalorder %s372, %s388
      %p390 = scmp.eq.s32.totalorder %s34, 0
      %p391 = por %p389, %p390
      %p392 = scmp.le.s32.totalorder 1, %s28
      %p393 = scmp.lt.s32.totalorder %s28, 3
      %p394 = pnand %p392, %p393
      %p395 = pneg %p394
      // Predicated region
      $region9: #{encoder_layer.1} parent=5 // pred_check
        _
      $region10: #{encoder_layer.1} parent=5 // pred_check_branch
        %397 = sbr.rel (%p394) target = $region12
      $region11: #{encoder_layer.1} parent=5 // pred_region
        %s398 = ssub.s32 %s28, 1
        // Predicated region
        $region13: #{encoder_layer.1} parent=11 // pred_check
          %p399 = pneg %p101
        $region14: #{encoder_layer.1} parent=11 // pred_check_branch
          %401 = sbr.rel (%p399) target = $region16
        $region15: #{encoder_layer.1} parent=11 // pred_region
          _
        $region16: #{encoder_layer.1} parent=11 // pred_fallthru
          _
        // Predicated region
        $region17: #{encoder_layer.1} parent=11 // pred_check
          %p402 = pneg %p122
        $region18: #{encoder_layer.1} parent=11 // pred_check_branch
          %404 = sbr.rel (%p402) target = $region20
        $region19: #{encoder_layer.1} parent=11 // pred_region
          _
        $region20: #{encoder_layer.1} parent=11 // pred_fallthru
          _
        // Predicated region
        $region21: #{encoder_layer.1} parent=11 // pred_check
          %p405 = pneg %p143
        $region22: #{encoder_layer.1} parent=11 // pred_check_branch
          %407 = sbr.rel (%p405) target = $region24
        $region23: #{encoder_layer.1} parent=11 // pred_region
          _
        $region24: #{encoder_layer.1} parent=11 // pred_fallthru
          _
        // Predicated region
        $region25: #{encoder_layer.1} parent=11 // pred_check
          %p408 = pneg %p164
        $region26: #{encoder_layer.1} parent=11 // pred_check_branch
          %410 = sbr.rel (%p408) target = $region28
        $region27: #{encoder_layer.1} parent=11 // pred_region
          _
        $region28: #{encoder_layer.1} parent=11 // pred_fallthru
          _
        // Predicated region
        $region29: #{encoder_layer.1} parent=11 // pred_check
          %p411 = pneg %p185
        $region30: #{encoder_layer.1} parent=11 // pred_check_branch
          %413 = sbr.rel (%p411) target = $region32
        $region31: #{encoder_layer.1} parent=11 // pred_region
          _
        $region32: #{encoder_layer.1} parent=11 // pred_fallthru
          _
        // Predicated region
        $region33: #{encoder_layer.1} parent=11 // pred_check
          %p414 = pneg %p206
        $region34: #{encoder_layer.1} parent=11 // pred_check_branch
          %416 = sbr.rel (%p414) target = $region36
        $region35: #{encoder_layer.1} parent=11 // pred_region
          _
        $region36: #{encoder_layer.1} parent=11 // pred_fallthru
          _
        // Predicated region
        $region37: #{encoder_layer.1} parent=11 // pred_check
          %p417 = pneg %p227
        $region38: #{encoder_layer.1} parent=11 // pred_check_branch
          %419 = sbr.rel (%p417) target = $region40
        $region39: #{encoder_layer.1} parent=11 // pred_region
          _
        $region40: #{encoder_layer.1} parent=11 // pred_fallthru
          _
        // Predicated region
        $region41: #{encoder_layer.1} parent=11 // pred_check
          %p420 = pneg %p248
        $region42: #{encoder_layer.1} parent=11 // pred_check_branch
          %422 = sbr.rel (%p420) target = $region44
        $region43: #{encoder_layer.1} parent=11 // pred_region
          _
        $region44: #{encoder_layer.1} parent=11 // pred_fallthru
          _
        // Predicated region
        $region45: #{encoder_layer.1} parent=11 // pred_check
          %p423 = pneg %p269
        $region46: #{encoder_layer.1} parent=11 // pred_check_branch
          %425 = sbr.rel (%p423) target = $region48
        $region47: #{encoder_layer.1} parent=11 // pred_region
          _
        $region48: #{encoder_layer.1} parent=11 // pred_fallthru
          _
        // Predicated region
        $region49: #{encoder_layer.1} parent=11 // pred_check
          %p426 = pneg %p290
        $region50: #{encoder_layer.1} parent=11 // pred_check_branch
          %428 = sbr.rel (%p426) target = $region52
        $region51: #{encoder_layer.1} parent=11 // pred_region
          _
        $region52: #{encoder_layer.1} parent=11 // pred_fallthru
          _
        // Predicated region
        $region53: #{encoder_layer.1} parent=11 // pred_check
          %p429 = pneg %p311
        $region54: #{encoder_layer.1} parent=11 // pred_check_branch
          %431 = sbr.rel (%p429) target = $region56
        $region55: #{encoder_layer.1} parent=11 // pred_region
          _
        $region56: #{encoder_layer.1} parent=11 // pred_fallthru
          _
        // Predicated region
        $region57: #{encoder_layer.1} parent=11 // pred_check
          %p432 = pneg %p332
        $region58: #{encoder_layer.1} parent=11 // pred_check_branch
          %434 = sbr.rel (%p432) target = $region60
        $region59: #{encoder_layer.1} parent=11 // pred_region
          _
        $region60: #{encoder_layer.1} parent=11 // pred_fallthru
          _
      $region12: #{encoder_layer.1} parent=5 // pred_fallthru
        _
      %p435 = scmp.lt.s32.totalorder %s28, 2
      // Predicated region
      $region61: #{encoder_layer.1} parent=5 // pred_check
        %p436 = pneg %p435
      $region62: #{encoder_layer.1} parent=5 // pred_check_branch
        %438 = sbr.rel (%p436) target = $region64
      $region63: #{encoder_layer.1} parent=5 // pred_region
        // Predicated region
        $region65: #{encoder_layer.1} parent=63 // pred_check
          %p439 = pneg %p48
        $region66: #{encoder_layer.1} parent=63 // pred_check_branch
          %441 = sbr.rel (%p439) target = $region68
        $region67: #{encoder_layer.1} parent=63 // pred_region
          %p442 = scmp.lt.s32.totalorder %s28, 1
          %s443 = scalar_select %p442, %s28, 1
          %s444 = smul.addr %s443, 8
          %s445 = scalar_lea.vmem %s0, %s444
        $region68: #{encoder_layer.1} parent=63 // pred_fallthru
          _
        // Predicated region
        $region69: #{encoder_layer.1} parent=63 // pred_check
          %p446 = pneg %p74
        $region70: #{encoder_layer.1} parent=63 // pred_check_branch
          %448 = sbr.rel (%p446) target = $region72
        $region71: #{encoder_layer.1} parent=63 // pred_region
          %p449 = scmp.lt.s32.totalorder %s28, 1
          %s450 = scalar_select %p449, %s28, 1
          %s451 = smul.addr %s450, 8
          %s452 = scalar_lea.vmem %s1, %s451
        $region72: #{encoder_layer.1} parent=63 // pred_fallthru
          _
      $region64: #{encoder_layer.1} parent=5 // pred_fallthru
        _
      %p453 = scmp.le.s32.totalorder 1, %s28
      %p454 = scmp.lt.s32.totalorder %s28, 3
      %p455 = pnand %p453, %p454
      %p456 = pneg %p455
      // Predicated region
      $region73: #{encoder_layer.1} parent=5 // pred_check
        _
      $region74: #{encoder_layer.1} parent=5 // pred_check_branch
        %458 = sbr.rel (%p455) target = $region76
      $region75: #{encoder_layer.1} parent=5 // pred_region
        %s459 = ssub.s32 %s28, 1
        %p460 = scmp.lt.s32.totalorder %s33, 1
        %s461 = scalar_select %p460, %s33, 1
        %s462 = smul.addr %s461, 8
        %s463 = scalar_lea.vmem %s0, %s462
        %p464 = pneg %p54
        %p465 = pneg %p51
        %p466 = scmp.lt.s32.totalorder %s33, 1
        %s467 = scalar_select %p466, %s33, 1
        %s468 = smul.addr %s467, 8
        %s469 = scalar_lea.vmem %s1, %s468
        %p470 = pneg %p80
        %p471 = pneg %p77
        %p472 = pneg %p101
        %p473 = pneg %p98
        %p474 = pneg %p122
        %p475 = pneg %p119
        %p476 = pneg %p143
        %p477 = pneg %p140
        %p478 = pneg %p164
        %p479 = pneg %p161
        %p480 = pneg %p185
        %p481 = pneg %p182
        %p482 = pneg %p206
        %p483 = pneg %p203
        %p484 = pneg %p227
        %p485 = pneg %p224
        %p486 = pneg %p248
        %p487 = pneg %p245
        %p488 = pneg %p269
        %p489 = pneg %p266
        %p490 = pneg %p290
        %p491 = pneg %p287
        %p492 = pneg %p311
        %p493 = pneg %p308
        %p494 = pneg %p332
        %p495 = pneg %p329
        %p496 = pneg %p358
        %p497 = pneg %p355
        %s498 = sand.u32 %s345, 1
        %s499 = scalar_lea.sflag [#allocation3], %s498
        %s500 = sand.u32 %s345, 1
        %s501 = smul.addr %s500, 8
        %s502 = scalar_lea.vmem [#allocation2], %s501
        %p503 = pneg %p384
        %p504 = pneg %p381
        %s505 = sand.u32 %s371, 1
        %s506 = scalar_lea.sflag [#allocation5], %s505
        %s507 = sand.u32 %s371, 1
        %s508 = smul.addr %s507, 8
        %s509 = scalar_lea.vmem [#allocation4], %s508
        %p510 = scmp.lt.s32.totalorder %s33, 1
        %s511 = scalar_select %p510, %s33, 1
        %s512 = smul.addr %s511, 8
        %s513 = scalar_lea.vmem %s0, %s512
        %p514 = scmp.lt.s32.totalorder %s33, 1
        %s515 = scalar_select %p514, %s33, 1
        %s516 = smul.addr %s515, 8
        %s517 = scalar_lea.vmem %s1, %s516
        %v519 = vld [vmem:[%s513] sm:$0xff]
        %v520 = vpack.c.bf16 %v519, %v519
        %v521 = vld [vmem:[%s517] sm:$0xff]
        %vm522 = vcmp.eq.s32.totalorder %v521, 0
        %v523 = vsel %vm522, -1e+09, 0.0
        %v524 = vld [vmem:[%s2] sm:$0xf]
        %v525 = vld [vmem:[%s2 + $0x4] sm:$0xf]
        %v526 = vld [vmem:[%s2 + $0x8] sm:$0xf]
        %v527 = vld [vmem:[%s2 + $0xc] sm:$0xf]
        %v532 = vunpack.c.l.b16 %v524
        %v533 = vunpack.c.l.b16 %v525
        %v534 = vunpack.c.l.b16 %v526
        %v535 = vunpack.c.l.b16 %v527
        %v536 = vpack.c.b16 %v533, %v532
        %v537 = vpack.c.b16 %v535, %v534
        %vm540 = vcmask 261120
        %v542 = vsel %vm540, %v520, 0
        %544 = vmatprep.subr.bf16.mxu0 0
        %545 = vmatpush1.bf16.msra.mxu0 %v536
        %546 = vmatprep.subr.bf16.mxu0 0
        %547 = vmatpush1.bf16.msra.mxu0 %v537
        %548 = vmatprep.subr.bf16.mxu0 0
        %549 = vmatpush1.bf16.msra.mxu0 0
        %550 = vmatprep.subr.bf16.mxu0 0
        %551 = vmatpush1.bf16.msra.mxu0 0
        %552 = vmatprep.subr.bf16.mxu0 0
        %553 = vmatpush1.bf16.msra.mxu0 0
        %554 = vmatprep.subr.bf16.mxu0 0
        %555 = vmatpush1.bf16.msra.mxu0 0
        %556 = vmatprep.subr.bf16.mxu0 0
        %557 = vmatpush1.bf16.msra.mxu0 0
        %558 = vmatprep.subr.bf16.mxu0 0
        %559 = vmatpush1.bf16.msra.mxu0 0
        %560 = vmatprep.subr.bf16.mxu0 0
        %561 = vmatpush1.bf16.msra.mxu0 0
        %562 = vmatprep.subr.bf16.mxu0 0
        %563 = vmatpush1.bf16.msra.mxu0 0
        %564 = vmatprep.subr.bf16.mxu0 0
        %565 = vmatpush1.bf16.msra.mxu0 0
        %566 = vmatprep.subr.bf16.mxu0 0
        %567 = vmatpush1.bf16.msra.mxu0 0
        %568 = vmatprep.subr.bf16.mxu0 0
        %569 = vmatpush1.bf16.msra.mxu0 0
        %570 = vmatprep.subr.bf16.mxu0 0
        %571 = vmatpush1.bf16.msra.mxu0 0
        %572 = vmatprep.subr.bf16.mxu0 0
        %573 = vmatpush1.bf16.msra.mxu0 0
        %574 = vmatprep.subr.bf16.mxu0 0
        %575 = vmatpush1.bf16.msra.mxu0 0
        %576 = vmatprep.mubr.bf16.mxu0 0
        %577 = vmatmul.mubr.bf16.gmra.mrb[0].mxu0 %v542
        %v578 = vpop.f32.mrb[0].mxu0
        %v579 = vadd.f32 0.0, %v578
        %v580 = vpop.f32.mrb[0].mxu0
        %v581 = vpop.f32.mrb[0].mxu0
        %v582 = vpop.f32.mrb[0].mxu0
        %583 = vdwg.mxu0
        %v584 = vpack.c.bf16 %v579, %v579
        %v585 = vld [vmem:[%s3] sm:$0xf]
        %v586 = vld [vmem:[%s3 + $0x4] sm:$0xf]
        %v587 = vld [vmem:[%s3 + $0x8] sm:$0xf]
        %v588 = vld [vmem:[%s3 + $0xc] sm:$0xf]
        %v593 = vunpack.c.l.b16 %v585
        %v594 = vunpack.c.l.b16 %v586
        %v595 = vunpack.c.l.b16 %v587
        %v596 = vunpack.c.l.b16 %v588
        %v597 = vpack.c.b16 %v594, %v593
        %v598 = vpack.c.b16 %v596, %v595
        %601 = vmatprep.subr.bf16.mxu0 0
        %602 = vmatpush1.bf16.msra.mxu0 %v597
        %603 = vmatprep.subr.bf16.mxu0 0
        %604 = vmatpush1.bf16.msra.mxu0 %v598
        %605 = vmatprep.subr.bf16.mxu0 0
        %606 = vmatpush1.bf16.msra.mxu0 0
        %607 = vmatprep.subr.bf16.mxu0 0
        %608 = vmatpush1.bf16.msra.mxu0 0
        %609 = vmatprep.subr.bf16.mxu0 0
        %610 = vmatpush1.bf16.msra.mxu0 0
        %611 = vmatprep.subr.bf16.mxu0 0
        %612 = vmatpush1.bf16.msra.mxu0 0
        %613 = vmatprep.subr.bf16.mxu0 0
        %614 = vmatpush1.bf16.msra.mxu0 0
        %615 = vmatprep.subr.bf16.mxu0 0
        %616 = vmatpush1.bf16.msra.mxu0 0
        %617 = vmatprep.subr.bf16.mxu0 0
        %618 = vmatpush1.bf16.msra.mxu0 0
        %619 = vmatprep.subr.bf16.mxu0 0
        %620 = vmatpush1.bf16.msra.mxu0 0
        %621 = vmatprep.subr.bf16.mxu0 0
        %622 = vmatpush1.bf16.msra.mxu0 0
        %623 = vmatprep.subr.bf16.mxu0 0
        %624 = vmatpush1.bf16.msra.mxu0 0
        %625 = vmatprep.subr.bf16.mxu0 0
        %626 = vmatpush1.bf16.msra.mxu0 0
        %627 = vmatprep.subr.bf16.mxu0 0
        %628 = vmatpush1.bf16.msra.mxu0 0
        %629 = vmatprep.subr.bf16.mxu0 0
        %630 = vmatpush1.bf16.msra.mxu0 0
        %631 = vmatprep.subr.bf16.mxu0 0
        %632 = vmatpush1.bf16.msra.mxu0 0
        %633 = vmatprep.mubr.bf16.mxu0 0
        %634 = vmatmul.mubr.bf16.gmra.mrb[0].mxu0 %v542
        %v635 = vpop.f32.mrb[0].mxu0
        %v636 = vadd.f32 0.0, %v635
        %v637 = vpop.f32.mrb[0].mxu0
        %v638 = vpop.f32.mrb[0].mxu0
        %v639 = vpop.f32.mrb[0].mxu0
        %640 = vdwg.mxu0
        %v641 = vpack.c.bf16 %v636, %v636
        %v642 = vld [vmem:[%s4] sm:$0xf]
        %v643 = vld [vmem:[%s4 + $0x4] sm:$0xf]
        %v644 = vld [vmem:[%s4 + $0x8] sm:$0xf]
        %v645 = vld [vmem:[%s4 + $0xc] sm:$0xf]
        %v650 = vunpack.c.l.b16 %v642
        %v651 = vunpack.c.l.b16 %v643
        %v652 = vunpack.c.l.b16 %v644
        %v653 = vunpack.c.l.b16 %v645
        %v654 = vpack.c.b16 %v651, %v650
        %v655 = vpack.c.b16 %v653, %v652
        %658 = vmatprep.subr.bf16.mxu0 0
        %659 = vmatpush1.bf16.msra.mxu0 %v654
        %660 = vmatprep.subr.bf16.mxu0 0
        %661 = vmatpush1.bf16.msra.mxu0 %v655
        %662 = vmatprep.subr.bf16.mxu0 0
        %663 = vmatpush1.bf16.msra.mxu0 0
        %664 = vmatprep.subr.bf16.mxu0 0
        %665 = vmatpush1.bf16.msra.mxu0 0
        %666 = vmatprep.subr.bf16.mxu0 0
        %667 = vmatpush1.bf16.msra.mxu0 0
        %668 = vmatprep.subr.bf16.mxu0 0
        %669 = vmatpush1.bf16.msra.mxu0 0
        %670 = vmatprep.subr.bf16.mxu0 0
        %671 = vmatpush1.bf16.msra.mxu0 0
        %672 = vmatprep.subr.bf16.mxu0 0
        %673 = vmatpush1.bf16.msra.mxu0 0
        %674 = vmatprep.subr.bf16.mxu0 0
        %675 = vmatpush1.bf16.msra.mxu0 0
        %676 = vmatprep.subr.bf16.mxu0 0
        %677 = vmatpush1.bf16.msra.mxu0 0
        %678 = vmatprep.subr.bf16.mxu0 0
        %679 = vmatpush1.bf16.msra.mxu0 0
        %680 = vmatprep.subr.bf16.mxu0 0
        %681 = vmatpush1.bf16.msra.mxu0 0
        %682 = vmatprep.subr.bf16.mxu0 0
        %683 = vmatpush1.bf16.msra.mxu0 0
        %684 = vmatprep.subr.bf16.mxu0 0
        %685 = vmatpush1.bf16.msra.mxu0 0
        %686 = vmatprep.subr.bf16.mxu0 0
        %687 = vmatpush1.bf16.msra.mxu0 0
        %688 = vmatprep.subr.bf16.mxu0 0
        %689 = vmatpush1.bf16.msra.mxu0 0
        %690 = vmatprep.mubr.bf16.mxu0 0
        %691 = vmatmul.mubr.bf16.gmra.mrb[0].mxu0 %v542
        %v692 = vpop.f32.mrb[0].mxu0
        %v693 = vadd.f32 0.0, %v692
        %v694 = vpop.f32.mrb[0].mxu0
        %v695 = vpop.f32.mrb[0].mxu0
        %v696 = vpop.f32.mrb[0].mxu0
        %697 = vdwg.mxu0
        %v698 = vpack.c.bf16 %v693, %v693
        %vm699 = vcmask 130048
        %v701 = vsel %vm699, %v584, 0
        %v704 = vsel %vm699, %v641, 0
        %706 = vmatprep.subr.bf16.mxu0 0
        %707 = vmatpush1.bf16.xpose.msra.mxu0 %v704
        %708 = vmatprep.subr.bf16.mxu0 0
        %709 = vmatpush1.bf16.xpose.msra.mxu0 0
        %710 = vmatprep.subr.bf16.mxu0 0
        %711 = vmatpush1.bf16.xpose.msra.mxu0 0
        %712 = vmatprep.subr.bf16.mxu0 0
        %713 = vmatpush1.bf16.xpose.msra.mxu0 0
        %714 = vmatprep.subr.bf16.mxu0 0
        %715 = vmatpush1.bf16.xpose.msra.mxu0 0
        %716 = vmatprep.subr.bf16.mxu0 0
        %717 = vmatpush1.bf16.xpose.msra.mxu0 0
        %718 = vmatprep.subr.bf16.mxu0 0
        %719 = vmatpush1.bf16.xpose.msra.mxu0 0
        %720 = vmatprep.subr.bf16.mxu0 0
        %721 = vmatpush1.bf16.xpose.msra.mxu0 0
        %722 = vmatprep.subr.bf16.mxu0 0
        %723 = vmatpush1.bf16.xpose.msra.mxu0 0
        %724 = vmatprep.subr.bf16.mxu0 0
        %725 = vmatpush1.bf16.xpose.msra.mxu0 0
        %726 = vmatprep.subr.bf16.mxu0 0
        %727 = vmatpush1.bf16.xpose.msra.mxu0 0
        %728 = vmatprep.subr.bf16.mxu0 0
        %729 = vmatpush1.bf16.xpose.msra.mxu0 0
        %730 = vmatprep.subr.bf16.mxu0 0
        %731 = vmatpush1.bf16.xpose.msra.mxu0 0
        %732 = vmatprep.subr.bf16.mxu0 0
        %733 = vmatpush1.bf16.xpose.msra.mxu0 0
        %734 = vmatprep.subr.bf16.mxu0 0
        %735 = vmatpush1.bf16.xpose.msra.mxu0 0
        %736 = vmatprep.subr.bf16.mxu0 0
        %737 = vmatpush1.bf16.xpose.msra.mxu0 0
        %738 = vmatprep.mubr.bf16.mxu0 0
        %739 = vmatmul.mubr.bf16.gmra.mrb[0].mxu0 %v701
        %v740 = vpop.f32.mrb[0].mxu0
        %v741 = vadd.f32 %v523, %v740
        %v742 = vpop.f32.mrb[0].mxu0
        %v743 = vpop.f32.mrb[0].mxu0
        %v744 = vpop.f32.mrb[0].mxu0
        %745 = vdwg.mxu0
        %vm746 = vcmask 64512
        %v747 = vsel %vm746, %v741, -inf
        %748 = vmax.xlane.f32.xlu0 %v747
        %v749 = vpop.xlane.xlu0 %748
        %v750 = vsub.f32 %v741, %v749
        %v751 = vmul.f32 %v750, 1.442695
        %v752 = vpow.pop %v751
        %v753 = vsel %vm746, %v752, 0.0
        %754 = vadd.xlane.f32.xlu0 %v753
        %v755 = vpop.xlane.xlu0 %754
        %v756 = vrcp.pop %v755
        %v757 = vmul.f32 %v752, %v756
        %v758 = vpack.c.bf16 %v757, %v757
        %v760 = vsel %vm746, %v758, 0
        %vm762 = vcmask 1043456
        %v764 = vsel %vm762, %v698, 0
        %766 = vmatprep.subr.bf16.mxu0 0
        %767 = vmatpush1.bf16.msra.mxu0 %v764
        %768 = vmatprep.subr.bf16.mxu0 0
        %769 = vmatpush1.bf16.msra.mxu0 0
        %770 = vmatprep.subr.bf16.mxu0 0
        %771 = vmatpush1.bf16.msra.mxu0 0
        %772 = vmatprep.subr.bf16.mxu0 0
        %773 = vmatpush1.bf16.msra.mxu0 0
        %774 = vmatprep.subr.bf16.mxu0 0
        %775 = vmatpush1.bf16.msra.mxu0 0
        %776 = vmatprep.subr.bf16.mxu0 0
        %777 = vmatpush1.bf16.msra.mxu0 0
        %778 = vmatprep.subr.bf16.mxu0 0
        %779 = vmatpush1.bf16.msra.mxu0 0
        %780 = vmatprep.subr.bf16.mxu0 0
        %781 = vmatpush1.bf16.msra.mxu0 0
        %782 = vmatprep.subr.bf16.mxu0 0
        %783 = vmatpush1.bf16.msra.mxu0 0
        %784 = vmatprep.subr.bf16.mxu0 0
        %785 = vmatpush1.bf16.msra.mxu0 0
        %786 = vmatprep.subr.bf16.mxu0 0
        %787 = vmatpush1.bf16.msra.mxu0 0
        %788 = vmatprep.subr.bf16.mxu0 0
        %789 = vmatpush1.bf16.msra.mxu0 0
        %790 = vmatprep.subr.bf16.mxu0 0
        %791 = vmatpush1.bf16.msra.mxu0 0
        %792 = vmatprep.subr.bf16.mxu0 0
        %793 = vmatpush1.bf16.msra.mxu0 0
        %794 = vmatprep.subr.bf16.mxu0 0
        %795 = vmatpush1.bf16.msra.mxu0 0
        %796 = vmatprep.subr.bf16.mxu0 0
        %797 = vmatpush1.bf16.msra.mxu0 0
        %798 = vmatprep.mubr.bf16.mxu0 0
        %799 = vmatmul.mubr.bf16.gmra.mrb[0].mxu0 %v760
        %v800 = vpop.f32.mrb[0].mxu0
        %v801 = vadd.f32 0.0, %v800
        %v802 = vpop.f32.mrb[0].mxu0
        %v803 = vpop.f32.mrb[0].mxu0
        %v804 = vpop.f32.mrb[0].mxu0
        %805 = vdwg.mxu0
        %v806 = vpack.c.bf16 %v801, %v801
        %808 = vrot.lane.b32.xlu0 %v584, 112
        %v809 = vpop.permute.xlu0 %808
        %811 = vrot.lane.b32.xlu0 %v641, 112
        %v812 = vpop.permute.xlu0 %811
        %v814 = vsel %vm699, %v809, 0
        %v817 = vsel %vm699, %v812, 0
        %819 = vmatprep.subr.bf16.mxu0 0
        %820 = vmatpush1.bf16.xpose.msra.mxu0 %v817
        %821 = vmatprep.subr.bf16.mxu0 0
        %822 = vmatpush1.bf16.xpose.msra.mxu0 0
        %823 = vmatprep.subr.bf16.mxu0 0
        %824 = vmatpush1.bf16.xpose.msra.mxu0 0
        %825 = vmatprep.subr.bf16.mxu0 0
        %826 = vmatpush1.bf16.xpose.msra.mxu0 0
        %827 = vmatprep.subr.bf16.mxu0 0
        %828 = vmatpush1.bf16.xpose.msra.mxu0 0
        %829 = vmatprep.subr.bf16.mxu0 0
        %830 = vmatpush1.bf16.xpose.msra.mxu0 0
        %831 = vmatprep.subr.bf16.mxu0 0
        %832 = vmatpush1.bf16.xpose.msra.mxu0 0
        %833 = vmatprep.subr.bf16.mxu0 0
        %834 = vmatpush1.bf16.xpose.msra.mxu0 0
        %835 = vmatprep.subr.bf16.mxu0 0
        %836 = vmatpush1.bf16.xpose.msra.mxu0 0
        %837 = vmatprep.subr.bf16.mxu0 0
        %838 = vmatpush1.bf16.xpose.msra.mxu0 0
        %839 = vmatprep.subr.bf16.mxu0 0
        %840 = vmatpush1.bf16.xpose.msra.mxu0 0
        %841 = vmatprep.subr.bf16.mxu0 0
        %842 = vmatpush1.bf16.xpose.msra.mxu0 0
        %843 = vmatprep.subr.bf16.mxu0 0
        %844 = vmatpush1.bf16.xpose.msra.mxu0 0
        %845 = vmatprep.subr.bf16.mxu0 0
        %846 = vmatpush1.bf16.xpose.msra.mxu0 0
        %847 = vmatprep.subr.bf16.mxu0 0
        %848 = vmatpush1.bf16.xpose.msra.mxu0 0
        %849 = vmatprep.subr.bf16.mxu0 0
        %850 = vmatpush1.bf16.xpose.msra.mxu0 0
        %851 = vmatprep.mubr.bf16.mxu0 0
        %852 = vmatmul.mubr.bf16.gmra.mrb[0].mxu0 %v814
        %v853 = vpop.f32.mrb[0].mxu0
        %v854 = vadd.f32 %v523, %v853
        %v855 = vpop.f32.mrb[0].mxu0
        %v856 = vpop.f32.mrb[0].mxu0
        %v857 = vpop.f32.mrb[0].mxu0
        %858 = vdwg.mxu0
        %v859 = vsel %vm746, %v854, -inf
        %860 = vmax.xlane.f32.xlu0 %v859
        %v861 = vpop.xlane.xlu0 %860
        %v862 = vsub.f32 %v854, %v861
        %v863 = vmul.f32 %v862, 1.442695
        %v864 = vpow.pop %v863
        %v865 = vsel %vm746, %v864, 0.0
        %866 = vadd.xlane.f32.xlu0 %v865
        %v867 = vpop.xlane.xlu0 %866
        %v868 = vrcp.pop %v867
        %v869 = vmul.f32 %v864, %v868
        %v870 = vpack.c.bf16 %v869, %v869
        %872 = vrot.lane.b32.xlu0 %v698, 112
        %v873 = vpop.permute.xlu0 %872
        %v875 = vsel %vm746, %v870, 0
        %v878 = vsel %vm762, %v873, 0
        %880 = vmatprep.subr.bf16.mxu0 0
        %881 = vmatpush1.bf16.msra.mxu0 %v878
        %882 = vmatprep.subr.bf16.mxu0 0
        %883 = vmatpush1.bf16.msra.mxu0 0
        %884 = vmatprep.subr.bf16.mxu0 0
        %885 = vmatpush1.bf16.msra.mxu0 0
        %886 = vmatprep.subr.bf16.mxu0 0
        %887 = vmatpush1.bf16.msra.mxu0 0
        %888 = vmatprep.subr.bf16.mxu0 0
        %889 = vmatpush1.bf16.msra.mxu0 0
        %890 = vmatprep.subr.bf16.mxu0 0
        %891 = vmatpush1.bf16.msra.mxu0 0
        %892 = vmatprep.subr.bf16.mxu0 0
        %893 = vmatpush1.bf16.msra.mxu0 0
        %894 = vmatprep.subr.bf16.mxu0 0
        %895 = vmatpush1.bf16.msra.mxu0 0
        %896 = vmatprep.subr.bf16.mxu0 0
        %897 = vmatpush1.bf16.msra.mxu0 0
        %898 = vmatprep.subr.bf16.mxu0 0
        %899 = vmatpush1.bf16.msra.mxu0 0
        %900 = vmatprep.subr.bf16.mxu0 0
        %901 = vmatpush1.bf16.msra.mxu0 0
        %902 = vmatprep.subr.bf16.mxu0 0
        %903 = vmatpush1.bf16.msra.mxu0 0
        %904 = vmatprep.subr.bf16.mxu0 0
        %905 = vmatpush1.bf16.msra.mxu0 0
        %906 = vmatprep.subr.bf16.mxu0 0
        %907 = vmatpush1.bf16.msra.mxu0 0
        %908 = vmatprep.subr.bf16.mxu0 0
        %909 = vmatpush1.bf16.msra.mxu0 0
        %910 = vmatprep.subr.bf16.mxu0 0
        %911 = vmatpush1.bf16.msra.mxu0 0
        %912 = vmatprep.mubr.bf16.mxu0 0
        %913 = vmatmul.mubr.bf16.gmra.mrb[0].mxu0 %v875
        %v914 = vpop.f32.mrb[0].mxu0
        %v915 = vadd.f32 0.0, %v914
        %v916 = vpop.f32.mrb[0].mxu0
        %v917 = vpop.f32.mrb[0].mxu0
        %v918 = vpop.f32.mrb[0].mxu0
        %919 = vdwg.mxu0
        %v920 = vpack.c.bf16 %v915, %v915
        %vm921 = vcmask 60416
        %922 = vst.msk [vmem:[%s509] sm:$0xf] %vm921, %v758
        %923 = vst.msk [vmem:[%s509 + $0x4] sm:$0xf] %vm921, %v870
        %925 = vrot.lane.b32.xlu0 %v920, 16
        %v926 = vpop.permute.xlu0 %925
        %v929 = vsel %vm699, %v806, %v926
        %v930 = vld [vmem:[%s5] sm:$0xf]
        %v931 = vld [vmem:[%s5 + $0x4] sm:$0xf]
        %v932 = vld [vmem:[%s5 + $0x8] sm:$0xf]
        %v933 = vld [vmem:[%s5 + $0xc] sm:$0xf]
        %v938 = vunpack.c.l.b16 %v930
        %v939 = vunpack.c.l.b16 %v931
        %v940 = vunpack.c.l.b16 %v932
        %v941 = vunpack.c.l.b16 %v933
        %v942 = vpack.c.b16 %v939, %v938
        %v943 = vpack.c.b16 %v941, %v940
        %v946 = vsel %vm540, %v929, 0
        %948 = vmatprep.subr.bf16.mxu0 0
        %949 = vmatpush1.bf16.msra.mxu0 %v942
        %950 = vmatprep.subr.bf16.mxu0 0
        %951 = vmatpush1.bf16.msra.mxu0 %v943
        %952 = vmatprep.subr.bf16.mxu0 0
        %953 = vmatpush1.bf16.msra.mxu0 0
        %954 = vmatprep.subr.bf16.mxu0 0
        %955 = vmatpush1.bf16.msra.mxu0 0
        %956 = vmatprep.subr.bf16.mxu0 0
        %957 = vmatpush1.bf16.msra.mxu0 0
        %958 = vmatprep.subr.bf16.mxu0 0
        %959 = vmatpush1.bf16.msra.mxu0 0
        %960 = vmatprep.subr.bf16.mxu0 0
        %961 = vmatpush1.bf16.msra.mxu0 0
        %962 = vmatprep.subr.bf16.mxu0 0
        %963 = vmatpush1.bf16.msra.mxu0 0
        %964 = vmatprep.subr.bf16.mxu0 0
        %965 = vmatpush1.bf16.msra.mxu0 0
        %966 = vmatprep.subr.bf16.mxu0 0
        %967 = vmatpush1.bf16.msra.mxu0 0
        %968 = vmatprep.subr.bf16.mxu0 0
        %969 = vmatpush1.bf16.msra.mxu0 0
        %970 = vmatprep.subr.bf16.mxu0 0
        %971 = vmatpush1.bf16.msra.mxu0 0
        %972 = vmatprep.subr.bf16.mxu0 0
        %973 = vmatpush1.bf16.msra.mxu0 0
        %974 = vmatprep.subr.bf16.mxu0 0
        %975 = vmatpush1.bf16.msra.mxu0 0
        %976 = vmatprep.subr.bf16.mxu0 0
        %977 = vmatpush1.bf16.msra.mxu0 0
        %978 = vmatprep.subr.bf16.mxu0 0
        %979 = vmatpush1.bf16.msra.mxu0 0
        %980 = vmatprep.mubr.bf16.mxu0 0
        %981 = vmatmul.mubr.bf16.gmra.mrb[0].mxu0 %v946
        %v982 = vpop.f32.mrb[0].mxu0
        %v983 = vadd.f32 %v519, %v982
        %v984 = vpop.f32.mrb[0].mxu0
        %v985 = vpop.f32.mrb[0].mxu0
        %v986 = vpop.f32.mrb[0].mxu0
        %987 = vdwg.mxu0
        %v988 = vsel %vm540, %v983, 0.0
        %989 = vadd.xlane.f32.xlu0 %v988
        %v990 = vpop.xlane.xlu0 %989
        %v991 = vrcp.pop 32.0
        %v992 = vmul.f32 %v990, %v991
        %v993 = vsub.f32 %v983, %v992
        %v994 = vmul.f32 %v993, %v993
        %v995 = vsel %vm540, %v994, 0.0
        %996 = vadd.xlane.f32.xlu0 %v995
        %v997 = vpop.xlane.xlu0 %996
        %v998 = vmul.f32 %v997, %v991
        %v999 = vadd.f32 %v998, 1e-06
        %v1000 = vrsqrt.pop %v999
        %v1001 = vmul.f32 %v993, %v1000
        %v1002 = vld [vmem:[%s6] sm:$0x1]
        %v1004 = vlaneseq
        %v1005 = vshrl.u32 %v1004, 7
        %v1006 = vsub.s32 0, %v1005
        %v1007 = vrot.slane %v1002, %v1006
        %v1009 = vmul.f32 %v1001, %v1007
        %v1010 = vld [vmem:[%s7] sm:$0x1]
        %v1012 = vlaneseq
        %v1013 = vshrl.u32 %v1012, 7
        %v1014 = vsub.s32 0, %v1013
        %v1015 = vrot.slane %v1010, %v1014
        %v1017 = vadd.f32 %v1009, %v1015
        %v1018 = vpack.c.bf16 %v1017, %v1017
        %v1019 = vld [vmem:[%s8] sm:$0xf]
        %v1020 = vld [vmem:[%s8 + $0x4] sm:$0xf]
        %v1021 = vld [vmem:[%s8 + $0x8] sm:$0xf]
        %v1022 = vld [vmem:[%s8 + $0xc] sm:$0xf]
        %v1023 = vld [vmem:[%s9] sm:$0x1]
        %v1025 = vlaneseq
        %v1026 = vshrl.u32 %v1025, 7
        %v1027 = vsub.s32 0, %v1026
        %v1028 = vrot.slane %v1023, %v1027
        %v1034 = vunpack.c.l.b16 %v1019
        %v1035 = vunpack.c.l.b16 %v1020
        %v1036 = vunpack.c.l.b16 %v1021
        %v1037 = vunpack.c.l.b16 %v1022
        %v1038 = vpack.c.b16 %v1035, %v1034
        %v1039 = vpack.c.b16 %v1037, %v1036
        %v1043 = vsel %vm540, %v1018, 0
        %1045 = vmatprep.subr.bf16.mxu0 0
        %1046 = vmatpush1.bf16.msra.mxu0 %v1038
        %1047 = vmatprep.subr.bf16.mxu0 0
        %1048 = vmatpush1.bf16.msra.mxu0 %v1039
        %1049 = vmatprep.subr.bf16.mxu0 0
        %1050 = vmatpush1.bf16.msra.mxu0 0
        %1051 = vmatprep.subr.bf16.mxu0 0
        %1052 = vmatpush1.bf16.msra.mxu0 0
        %1053 = vmatprep.subr.bf16.mxu0 0
        %1054 = vmatpush1.bf16.msra.mxu0 0
        %1055 = vmatprep.subr.bf16.mxu0 0
        %1056 = vmatpush1.bf16.msra.mxu0 0
        %1057 = vmatprep.subr.bf16.mxu0 0
        %1058 = vmatpush1.bf16.msra.mxu0 0
        %1059 = vmatprep.subr.bf16.mxu0 0
        %1060 = vmatpush1.bf16.msra.mxu0 0
        %1061 = vmatprep.subr.bf16.mxu0 0
        %1062 = vmatpush1.bf16.msra.mxu0 0
        %1063 = vmatprep.subr.bf16.mxu0 0
        %1064 = vmatpush1.bf16.msra.mxu0 0
        %1065 = vmatprep.subr.bf16.mxu0 0
        %1066 = vmatpush1.bf16.msra.mxu0 0
        %1067 = vmatprep.subr.bf16.mxu0 0
        %1068 = vmatpush1.bf16.msra.mxu0 0
        %1069 = vmatprep.subr.bf16.mxu0 0
        %1070 = vmatpush1.bf16.msra.mxu0 0
        %1071 = vmatprep.subr.bf16.mxu0 0
        %1072 = vmatpush1.bf16.msra.mxu0 0
        %1073 = vmatprep.subr.bf16.mxu0 0
        %1074 = vmatpush1.bf16.msra.mxu0 0
        %1075 = vmatprep.subr.bf16.mxu0 0
        %1076 = vmatpush1.bf16.msra.mxu0 0
        %1077 = vmatprep.mubr.bf16.mxu0 0
        %1078 = vmatmul.mubr.bf16.gmra.mrb[0].mxu0 %v1043
        %v1079 = vpop.f32.mrb[0].mxu0
        %v1080 = vadd.f32 %v1028, %v1079
        %v1081 = vpop.f32.mrb[0].mxu0
        %v1082 = vpop.f32.mrb[0].mxu0
        %v1083 = vpop.f32.mrb[0].mxu0
        %1084 = vdwg.mxu0
        %v1085 = vmax.f32 %v1080, 0.0
        %v1086 = vpack.c.bf16 %v1085, %v1085
        %v1087 = vld [vmem:[%s10] sm:$0xf]
        %v1088 = vld [vmem:[%s10 + $0x4] sm:$0xf]
        %v1089 = vld [vmem:[%s10 + $0x8] sm:$0xf]
        %v1090 = vld [vmem:[%s10 + $0xc] sm:$0xf]
        %v1091 = vld [vmem:[%s10 + $0x10] sm:$0xf]
        %v1092 = vld [vmem:[%s10 + $0x14] sm:$0xf]
        %v1093 = vld [vmem:[%s10 + $0x18] sm:$0xf]
        %v1094 = vld [vmem:[%s10 + $0x1c] sm:$0xf]
        %v1095 = vld [vmem:[%s11] sm:$0x1]
        %v1097 = vlaneseq
        %v1098 = vshrl.u32 %v1097, 7
        %v1099 = vsub.s32 0, %v1098
        %v1100 = vrot.slane %v1095, %v1099
        %v1110 = vunpack.c.l.b16 %v1087
        %v1111 = vunpack.c.l.b16 %v1088
        %v1112 = vunpack.c.l.b16 %v1089
        %v1113 = vunpack.c.l.b16 %v1090
        %v1114 = vunpack.c.l.b16 %v1091
        %v1115 = vunpack.c.l.b16 %v1092
        %v1116 = vunpack.c.l.b16 %v1093
        %v1117 = vunpack.c.l.b16 %v1094
        %v1118 = vpack.c.b16 %v1111, %v1110
        %v1119 = vpack.c.b16 %v1113, %v1112
        %v1120 = vpack.c.b16 %v1115, %v1114
        %v1121 = vpack.c.b16 %v1117, %v1116
        %vm1126 = vcmask 523264
        %v1128 = vsel %vm1126, %v1086, 0
        %1130 = vmatprep.subr.bf16.mxu0 0
        %1131 = vmatpush1.bf16.msra.mxu0 %v1118
        %1132 = vmatprep.subr.bf16.mxu0 0
        %1133 = vmatpush1.bf16.msra.mxu0 %v1119
        %1134 = vmatprep.subr.bf16.mxu0 0
        %1135 = vmatpush1.bf16.msra.mxu0 %v1120
        %1136 = vmatprep.subr.bf16.mxu0 0
        %1137 = vmatpush1.bf16.msra.mxu0 %v1121
        %1138 = vmatprep.subr.bf16.mxu0 0
        %1139 = vmatpush1.bf16.msra.mxu0 0
        %1140 = vmatprep.subr.bf16.mxu0 0
        %1141 = vmatpush1.bf16.msra.mxu0 0
        %1142 = vmatprep.subr.bf16.mxu0 0
        %1143 = vmatpush1.bf16.msra.mxu0 0
        %1144 = vmatprep.subr.bf16.mxu0 0
        %1145 = vmatpush1.bf16.msra.mxu0 0
        %1146 = vmatprep.subr.bf16.mxu0 0
        %1147 = vmatpush1.bf16.msra.mxu0 0
        %1148 = vmatprep.subr.bf16.mxu0 0
        %1149 = vmatpush1.bf16.msra.mxu0 0
        %1150 = vmatprep.subr.bf16.mxu0 0
        %1151 = vmatpush1.bf16.msra.mxu0 0
        %1152 = vmatprep.subr.bf16.mxu0 0
        %1153 = vmatpush1.bf16.msra.mxu0 0
        %1154 = vmatprep.subr.bf16.mxu0 0
        %1155 = vmatpush1.bf16.msra.mxu0 0
        %1156 = vmatprep.subr.bf16.mxu0 0
        %1157 = vmatpush1.bf16.msra.mxu0 0
        %1158 = vmatprep.subr.bf16.mxu0 0
        %1159 = vmatpush1.bf16.msra.mxu0 0
        %1160 = vmatprep.subr.bf16.mxu0 0
        %1161 = vmatpush1.bf16.msra.mxu0 0
        %1162 = vmatprep.mubr.bf16.mxu0 0
        %1163 = vmatmul.mubr.bf16.gmra.mrb[0].mxu0 %v1128
        %v1164 = vpop.f32.mrb[0].mxu0
        %v1165 = vadd.f32 %v1100, %v1164
        %v1166 = vpop.f32.mrb[0].mxu0
        %v1167 = vpop.f32.mrb[0].mxu0
        %v1168 = vpop.f32.mrb[0].mxu0
        %1169 = vdwg.mxu0
        %v1170 = vadd.f32 %v1165, %v1017
        %v1171 = vsel %vm540, %v1170, 0.0
        %1172 = vadd.xlane.f32.xlu0 %v1171
        %v1173 = vpop.xlane.xlu0 %1172
        %v1174 = vmul.f32 %v1173, %v991
        %v1175 = vsub.f32 %v1170, %v1174
        %v1176 = vmul.f32 %v1175, %v1175
        %v1177 = vsel %vm540, %v1176, 0.0
        %1178 = vadd.xlane.f32.xlu0 %v1177
        %v1179 = vpop.xlane.xlu0 %1178
        %v1180 = vmul.f32 %v1179, %v991
        %v1181 = vadd.f32 %v1180, 1e-06
        %v1182 = vrsqrt.pop %v1181
        %v1183 = vmul.f32 %v1175, %v1182
        %v1184 = vld [vmem:[%s12] sm:$0x1]
        %v1186 = vlaneseq
        %v1187 = vshrl.u32 %v1186, 7
        %v1188 = vsub.s32 0, %v1187
        %v1189 = vrot.slane %v1184, %v1188
        %v1191 = vmul.f32 %v1183, %v1189
        %v1192 = vld [vmem:[%s13] sm:$0x1]
        %v1194 = vlaneseq
        %v1195 = vshrl.u32 %v1194, 7
        %v1196 = vsub.s32 0, %v1195
        %v1197 = vrot.slane %v1192, %v1196
        %v1199 = vadd.f32 %v1191, %v1197
        %1200 = vst.msk [vmem:[%s502] sm:$0xff] %vm540, %v1199
        %s1201 = sand.u32 %s345, 1
        %s1202 = scalar_lea.sflag [#allocation3], %s1201
        %s1203 = sand.u32 %s345, 1
        %s1204 = smul.addr %s1203, 8
        %s1205 = scalar_lea.vmem [#allocation2], %s1204
        %s1206 = sand.u32 %s371, 1
        %s1207 = scalar_lea.sflag [#allocation5], %s1206
        %s1208 = sand.u32 %s371, 1
        %s1209 = smul.addr %s1208, 8
        %s1210 = scalar_lea.vmem [#allocation4], %s1209
        // Predicated region
        $region77: #{encoder_layer.1} parent=75 // pred_check
          %p1211 = pneg %p355
        $region78: #{encoder_layer.1} parent=75 // pred_check_branch
          %1213 = sbr.rel (%p1211) target = $region80
        $region79: #{encoder_layer.1} parent=75 // pred_region
          %s1215 = ssub.s32 128, 128
          %1216 = vsyncadd %s1202, %s1215
          %s1217 = smul.addr %s33, 128
          %s1218 = scalar_lea.hbm %s14, %s1217
          %s1220 = sshll.u32 %s1205, 4
          %s1221 = int_to_ptr.vmem [resolvable:$true] %s1220
          %1223 = dma.vmem_to_hbm [thread:$0]  %s1221, 128, %s1218, %s1202
        $region80: #{encoder_layer.1} parent=75 // pred_fallthru
          _
        // Predicated region
        $region81: #{encoder_layer.1} parent=75 // pred_check
          %p1224 = pneg %p381
        $region82: #{encoder_layer.1} parent=75 // pred_check_branch
          %1226 = sbr.rel (%p1224) target = $region84
        $region83: #{encoder_layer.1} parent=75 // pred_region
          %s1228 = ssub.s32 128, 128
          %1229 = vsyncadd %s1207, %s1228
          %s1230 = smul.addr %s33, 2
          %s1231 = smul.addr %s1230, 64
          %s1232 = scalar_lea.hbm %s15, %s1231
          %s1233 = sshll.u32 %s1210, 4
          %s1234 = int_to_ptr.vmem [resolvable:$true] %s1233
          %1239 = dma.vmem_to_hbm [thread:$0]  %s1234, 128, %s1232, %s1207, 64, 64, 4
        $region84: #{encoder_layer.1} parent=75 // pred_fallthru
          _
      $region76: #{encoder_layer.1} parent=5 // pred_fallthru
        _
      %p1240 = scmp.le.s32.totalorder 2, %s28
      // Predicated region
      $region85: #{encoder_layer.1} parent=5 // pred_check
        %p1241 = pneg %p1240
      $region86: #{encoder_layer.1} parent=5 // pred_check_branch
        %1243 = sbr.rel (%p1241) target = $region88
      $region87: #{encoder_layer.1} parent=5 // pred_region
        %s1244 = ssub.s32 %s28, 2
        // Predicated region
        $region89: #{encoder_layer.1} parent=87 // pred_check
          %p1245 = pneg %p361
        $region90: #{encoder_layer.1} parent=87 // pred_check_branch
          %1247 = sbr.rel (%p1245) target = $region92
        $region91: #{encoder_layer.1} parent=87 // pred_region
          %s1248 = sand.u32 %s346, 1
          %s1249 = scalar_lea.sflag [#allocation3], %s1248
          %s1250 = sand.u32 %s346, 1
          %s1251 = smul.addr %s1250, 8
          %s1252 = scalar_lea.vmem [#allocation2], %s1251
          %1253 = dma.done %s1249, 128
        $region92: #{encoder_layer.1} parent=87 // pred_fallthru
          _
        // Predicated region
        $region93: #{encoder_layer.1} parent=87 // pred_check
          %p1254 = pneg %p387
        $region94: #{encoder_layer.1} parent=87 // pred_check_branch
          %1256 = sbr.rel (%p1254) target = $region96
        $region95: #{encoder_layer.1} parent=87 // pred_region
          %s1257 = sand.u32 %s372, 1
          %s1258 = scalar_lea.sflag [#allocation5], %s1257
          %s1259 = sand.u32 %s372, 1
          %s1260 = smul.addr %s1259, 8
          %s1261 = scalar_lea.vmem [#allocation4], %s1260
          %1262 = dma.done %s1258, 128
        $region96: #{encoder_layer.1} parent=87 // pred_fallthru
          _
      $region88: #{encoder_layer.1} parent=5 // pred_fallthru
        _
    $region6: #{encoder_layer.1} parent=1 // loop_footer
      %s32 = sadd.s32 1, %s28
    $region7: #{encoder_layer.1} parent=1 // loop_footer_branch
      %27 = sbr.rel target = $region3
    $region8: #{encoder_layer.1} parent=1 // loop_exit
      _
    %1263 = vsyncpa [#allocation3], 1
    %s1264 = scalar_lea.sflag [#allocation3], 1
    %1265 = vsyncpa %s1264, 1
    %1266 = vsyncpa [#allocation5], 1
    %s1267 = scalar_lea.sflag [#allocation5], 1
    %1268 = vsyncpa %s1267, 1

</llo_original>
